<compile_context>
chip_gen: v7x
topology: tpu7x:2x2x1
jax: 0.10.0
libtpu: 0.0.40
codegen_flags: <defaults>
</compile_context>

<pallas_src>
import functools
import itertools

import numpy as np
import jax
import jax.numpy as jnp
from jax.experimental import pallas as pl
from jax.experimental.pallas import tpu as pltpu

# ----------------------------------------------------------------------------
# Standard JPEG tables + DCT basis (same values/shapes the PyTorch module builds).
# ----------------------------------------------------------------------------
y_table_np = np.array(
    [[16, 11, 10, 16, 24, 40, 51, 61],
     [12, 12, 14, 19, 26, 58, 60, 55],
     [14, 13, 16, 24, 40, 57, 69, 56],
     [14, 17, 22, 29, 51, 87, 80, 62],
     [18, 22, 37, 56, 68, 109, 103, 77],
     [24, 35, 55, 64, 81, 104, 113, 92],
     [49, 64, 78, 87, 103, 121, 120, 101],
     [72, 92, 95, 98, 112, 100, 103, 99]], dtype=np.float32).T

c_table_np = np.empty((8, 8), dtype=np.float32)
c_table_np.fill(99)
c_table_np[:4, :4] = np.array([[17, 18, 24, 47], [18, 21, 26, 66],
                               [24, 26, 56, 99], [47, 66, 99, 99]],
                              dtype=np.float32).T

_dct_tensor = np.zeros((8, 8, 8, 8), dtype=np.float32)
for _x, _y, _u, _v in itertools.product(range(8), repeat=4):
    _dct_tensor[_x, _y, _u, _v] = (np.cos((2 * _x + 1) * _u * np.pi / 16) *
                                   np.cos((2 * _y + 1) * _v * np.pi / 16))
_alpha = np.array([1.0 / np.sqrt(2)] + [1.0] * 7)
dct_scale_np = (np.outer(_alpha, _alpha) * 0.25).astype(np.float32)   # (8, 8) [u, v]


# ----------------------------------------------------------------------------
# Tiling helpers
# ----------------------------------------------------------------------------
def _pick_tile(n, cap, mult):
    """Largest multiple of `mult` that divides n and is <= cap; falls back to n."""
    best = None
    d = mult
    lim = min(n, cap)
    while d <= lim:
        if n % d == 0:
            best = d
        d += mult
    return best if best is not None else n


def _pick_tbr(hb, other_steps):
    """Row tile (in 8-row block-rows) for the DCT kernel: a multiple-of-8 divisor of
    hb (<= 256), small enough that the total grid keeps >= ~4 steps; falls back to
    the full extent (always a legal block)."""
    cap = 256
    if other_steps < 4:
        need = -(-4 // max(other_steps, 1))
        cap = min(cap, max(8, hb // need))
    best = None
    d = 8
    lim = min(cap, hb)
    while d <= lim:
        if hb % d == 0:
            best = d
        d += 8
    return best if best is not None else hb


# ----------------------------------------------------------------------------
# Kernel 1: RGB->YCbCr (x255 and level shift folded) + chroma 2x2 average pooling.
#   Input tile  : (1, 3, TH, TW) of the NCHW image
#   Outputs     : Y - 128 (full res) and centered Cb/Cr (half res), per tile.
#   Pooling is two small matmuls: (TH/2, TH) on sublanes, (TW, TW/2) on lanes, so
#   the pooling operands stay tiny regardless of the image width.
# ----------------------------------------------------------------------------
def rgb_ycc_sub_kernel(x_ref, pv_ref, ph_ref, y_ref, cb_ref, cr_ref):
    r = x_ref[0, 0]
    g = x_ref[0, 1]
    b = x_ref[0, 2]

    # *255 folded into the RGB->YCbCr coefficients.  JPEG level shift folded too:
    # Y is written already minus 128; the +128 on Cb/Cr and the -128 before the DCT
    # cancel exactly, so the chroma planes are written centered (no shift at all).
    y_ref[0] = ((0.299 * 255.0) * r + (0.587 * 255.0) * g + (0.114 * 255.0) * b
                - 128.0)
    cb = (-0.168736 * 255.0) * r + (-0.331264 * 255.0) * g + (0.5 * 255.0) * b
    cr = (0.5 * 255.0) * r + (-0.418688 * 255.0) * g + (-0.081312 * 255.0) * b

    pv = pv_ref[...]   # (TH/2, TH) vertical pair-average (entries 0.5)
    ph = ph_ref[...]   # (TW, TW/2) horizontal pair-average (entries 0.5)
    cb_ref[0] = jnp.dot(jnp.dot(pv, cb, preferred_element_type=jnp.float32), ph,
                        preferred_element_type=jnp.float32)
    cr_ref[0] = jnp.dot(jnp.dot(pv, cr, preferred_element_type=jnp.float32), ph,
                        preferred_element_type=jnp.float32)


def rgb_to_ycc_subsample(image):
    B, C, H, W = image.shape
    assert C == 3 and H % 2 == 0 and W % 2 == 0
    x = image.astype(jnp.float32)

    th = _pick_tile(H, 256, 16)    # multiple of 16 (so TH/2 is a multiple of 8)
    tw = _pick_tile(W, 1024, 256)  # multiple of 256 (so TW/2 is a multiple of 128)

    ii = np.arange(th // 2)
    pv = np.zeros((th // 2, th), dtype=np.float32)
    pv[ii, 2 * ii] = 0.5
    pv[ii, 2 * ii + 1] = 0.5
    jj = np.arange(tw // 2)
    ph = np.zeros((tw, tw // 2), dtype=np.float32)
    ph[2 * jj, jj] = 0.5
    ph[2 * jj + 1, jj] = 0.5

    y, cb, cr = pl.pallas_call(
        rgb_ycc_sub_kernel,
        out_shape=(jax.ShapeDtypeStruct((B, H, W), jnp.float32),
                   jax.ShapeDtypeStruct((B, H // 2, W // 2), jnp.float32),
                   jax.ShapeDtypeStruct((B, H // 2, W // 2), jnp.float32)),
        grid_spec=pltpu.PrefetchScalarGridSpec(
            num_scalar_prefetch=0,
            grid=(B, H // th, W // tw),
            in_specs=[pl.BlockSpec((1, 3, th, tw), lambda b, i, j: (b, 0, i, j)),
                      pl.BlockSpec((th // 2, th), lambda b, i, j: (0, 0)),
                      pl.BlockSpec((tw, tw // 2), lambda b, i, j: (0, 0))],
            out_specs=[pl.BlockSpec((1, th, tw), lambda b, i, j: (b, i, j)),
                       pl.BlockSpec((1, th // 2, tw // 2), lambda b, i, j: (b, i, j)),
                       pl.BlockSpec((1, th // 2, tw // 2), lambda b, i, j: (b, i, j))]),
        compiler_params=pltpu.CompilerParams(
            dimension_semantics=("parallel", "parallel", "parallel"),
            vmem_limit_bytes=32 * 1024 * 1024),
    )(x, jnp.asarray(pv), jnp.asarray(ph))
    return y, cb, cr


# ----------------------------------------------------------------------------
# Kernel 2: 8x8 DCT + quantize + round, writing packed block layout directly.
#   Input view  : plane (N, h, w) -> free reshape (N, h/8, 8, w); tile (1, TBR, 8, TWd)
#   Output view : (N, h/8, 8*w); tile (1, TBR, 8*TWd) -- a free view of (N, nb, 8, 8)
#   Per block-row t the 8 within-block rows are lane-concatenated and multiplied by a
#   block-structured (8*TWd, 8*TWd) matrix carrying DCT basis * scale / (table*factor),
#   which performs the DCT, the quantization AND the spatial->block reordering in one
#   MXU pass (no XLA transpose, no in-kernel relayout).
# ----------------------------------------------------------------------------
def dct_pack_kernel(x_ref, g_ref, o_ref):
    # x_ref: (1, TBR, 8, TWd); g_ref: (8*TWd, 8*TWd); o_ref: (1, TBR, 8*TWd)
    xc = jnp.concatenate([x_ref[0, :, i, :] for i in range(8)], axis=-1)
    o_ref[0] = jnp.round(jnp.dot(xc, g_ref[...], preferred_element_type=jnp.float32))


def _build_dct_pack_matrix(twd, table_np, factor):
    """(8*twd, 8*twd) matrix G with
       G[i*twd + 8c + j, c*64 + 8u + v] = dct[i,j,u,v] * scale[u,v] / (table[u,v]*f)."""
    nb = twd // 8
    qc = dct_scale_np / (table_np * float(factor))                      # (8,8) [u,v]
    base = (_dct_tensor * qc[None, None, :, :]).astype(np.float32)      # (i,j,u,v)
    base2 = base.reshape(8, 8, 64)                                      # (i, j, 8u+v)
    g = np.zeros((8 * twd, 8 * twd), dtype=np.float32)
    for i in range(8):
        for c in range(nb):
            g[i * twd + 8 * c: i * twd + 8 * c + 8, c * 64: (c + 1) * 64] = base2[i]
    return g


def dct_quantize_packed(plane, table_np, factor=1.0):
    """plane: (N, h, w), already level-shifted.  Returns (N, h*w/64, 8, 8)."""
    N, h, w = plane.shape
    assert h % 8 == 0 and w % 8 == 0, "plane dims must be multiples of 8"
    hb = h // 8
    twd = 128 if (w > 128 and w % 128 == 0) else w
    other_steps = N * (w // twd)
    tbr = _pick_tbr(hb, other_steps)

    g = _build_dct_pack_matrix(twd, table_np, factor)
    v = plane.reshape(N, hb, 8, w)          # free (row-major) view

    out = pl.pallas_call(
        dct_pack_kernel,
        out_shape=jax.ShapeDtypeStruct((N, hb, 8 * w), jnp.float32),
        grid_spec=pltpu.PrefetchScalarGridSpec(
            num_scalar_prefetch=0,
            grid=(N, hb // tbr, w // twd),
            in_specs=[pl.BlockSpec((1, tbr, 8, twd), lambda n, r, c: (n, r, 0, c)),
                      pl.BlockSpec((8 * twd, 8 * twd), lambda n, r, c: (0, 0))],
            out_specs=pl.BlockSpec((1, tbr, 8 * twd), lambda n, r, c: (n, r, c))),
        compiler_params=pltpu.CompilerParams(
            dimension_semantics=("parallel", "parallel", "parallel"),
            vmem_limit_bytes=32 * 1024 * 1024),
    )(v, jnp.asarray(g))

    # Free row-major views back to the module's (N, nb, 8, 8) layout.
    return out.reshape(N, hb * (w // 8), 8, 8)


# ----------------------------------------------------------------------------
# Full compress_jpeg forward
# ----------------------------------------------------------------------------
@functools.partial(jax.jit, static_argnames=("factor",))
def compress_jpeg(image, factor=1.0):
    """image: (B, 3, H, W) float32 in [0, 1] (the module multiplies by 255)."""
    B, C, H, W = image.shape
    assert C == 3 and H % 16 == 0 and W % 16 == 0, "compress_jpeg needs H, W % 16 == 0"
    y, cb, cr = rgb_to_ycc_subsample(image)          # y already -128; cb/cr centered
    y_q = dct_quantize_packed(y, y_table_np, factor)
    cb_q = dct_quantize_packed(cb, c_table_np, factor)
    cr_q = dct_quantize_packed(cr, c_table_np, factor)
    return y_q, cb_q, cr_q


# ----------------------------------------------------------------------------
# Pure-JAX reference (mirrors the torch module) for the sanity check in __main__.
# ----------------------------------------------------------------------------
def _ref_compress(image, factor=1.0):
    img = image.astype(jnp.float32) * 255.0
    x = jnp.transpose(img, (0, 2, 3, 1))
    m = jnp.asarray(np.array([[0.299, 0.587, 0.114],
                              [-0.168736, -0.331264, 0.5],
                              [0.5, -0.418688, -0.081312]], dtype=np.float32).T)
    ycc = jnp.tensordot(x, m, axes=1) + jnp.asarray([0.0, 128.0, 128.0], dtype=jnp.float32)
    y = ycc[..., 0]

    def pool(c):
        B, H, W = c.shape
        return c.reshape(B, H // 2, 2, W // 2, 2).mean(axis=(2, 4))

    cb, cr = pool(ycc[..., 1]), pool(ycc[..., 2])

    def dct_q(comp, table):
        B, h, w = comp.shape
        blk = comp.reshape(B, h // 8, 8, w // 8, 8)
        blk = jnp.transpose(blk, (0, 1, 3, 2, 4)).reshape(B, -1, 8, 8) - 128.0
        res = jnp.asarray(dct_scale_np) * jnp.tensordot(blk, jnp.asarray(_dct_tensor), axes=2)
        res = res / (jnp.asarray(table) * factor)
        return jnp.round(res)

    return dct_q(y, y_table_np), dct_q(cb, c_table_np), dct_q(cr, c_table_np)


if __name__ == "__main__":
    key = jax.random.PRNGKey(0)
    B, H, W = 2, 16, 16
    x = jax.random.uniform(key, (B, 3, H, W), dtype=jnp.float32)

    y_q, cb_q, cr_q = compress_jpeg(x, factor=1.0)
    jax.block_until_ready((y_q, cb_q, cr_q))

    assert y_q.shape == (B, (H // 8) * (W // 8), 8, 8)
    assert cb_q.shape == (B, (H // 16) * (W // 16), 8, 8)
    assert cr_q.shape == (B, (H // 16) * (W // 16), 8, 8)
    assert bool(jnp.all(jnp.isfinite(y_q)))
    assert bool(jnp.all(jnp.isfinite(cb_q)))
    assert bool(jnp.all(jnp.isfinite(cr_q)))

    # Loose numerical check vs. the pure-JAX reference (folding scale/quant/level
    # shifts changes float associativity; allow rare off-by-one flips at exact .5
    # rounding boundaries).
    refs = _ref_compress(x, 1.0)
    for got, ref in zip((y_q, cb_q, cr_q), refs):
        diff = jnp.abs(got - ref)
        assert float(jnp.max(diff)) <= 1.0 + 1e-3
        assert float(jnp.mean((diff < 0.5).astype(jnp.float32))) > 0.95

    print("KERNEL_OK")
</pallas_src>

<mosaic_0001>
module attributes {stable_mosaic.version = 11 : i64} {
  func.func @dct_pack_kernel(%arg0: i32, %arg1: i32, %arg2: i32, %arg3: memref<1x1x8x8xf32, #tpu.memory_space<vmem>>, %arg4: memref<64x64xf32, #tpu.memory_space<vmem>>, %arg5: memref<1x1x64xf32, #tpu.memory_space<vmem>>) attributes {dimension_semantics = [#tpu.dimension_semantics<parallel>, #tpu.dimension_semantics<parallel>, #tpu.dimension_semantics<parallel>], iteration_bounds = array<i64: 2, 1, 1>, scalar_prefetch = 0 : i64, scratch_operands = 0 : i64, tpu.core_type = #tpu.core_type<tc>, window_params = [{transform_indices = @transform_0, window_bounds = array<i64: 1, 1, 8, 8>}, {pipeline_mode = #tpu.pipeline_mode<synchronous>, transform_indices = @transform_1, window_bounds = array<i64: 64, 64>}, {transform_indices = @transform_2, window_bounds = array<i64: 1, 1, 64>}]} {
    %c0 = arith.constant 0 : index
    %c0_0 = arith.constant 0 : index
    %c0_1 = arith.constant 0 : index
    %c0_2 = arith.constant 0 : index
    %0 = vector.load %arg3[%c0, %c0_0, %c0_1, %c0_2] : memref<1x1x8x8xf32, #tpu.memory_space<vmem>>, vector<1x1x1x8xf32>
    %1 = vector.shape_cast %0 : vector<1x1x1x8xf32> to vector<1x8xf32>
    %c0_3 = arith.constant 0 : index
    %c0_4 = arith.constant 0 : index
    %c1 = arith.constant 1 : index
    %c0_5 = arith.constant 0 : index
    %2 = vector.load %arg3[%c0_3, %c0_4, %c1, %c0_5] : memref<1x1x8x8xf32, #tpu.memory_space<vmem>>, vector<1x1x1x8xf32>
    %3 = vector.shape_cast %2 : vector<1x1x1x8xf32> to vector<1x8xf32>
    %c0_6 = arith.constant 0 : index
    %c0_7 = arith.constant 0 : index
    %c2 = arith.constant 2 : index
    %c0_8 = arith.constant 0 : index
    %4 = vector.load %arg3[%c0_6, %c0_7, %c2, %c0_8] : memref<1x1x8x8xf32, #tpu.memory_space<vmem>>, vector<1x1x1x8xf32>
    %5 = vector.shape_cast %4 : vector<1x1x1x8xf32> to vector<1x8xf32>
    %c0_9 = arith.constant 0 : index
    %c0_10 = arith.constant 0 : index
    %c3 = arith.constant 3 : index
    %c0_11 = arith.constant 0 : index
    %6 = vector.load %arg3[%c0_9, %c0_10, %c3, %c0_11] : memref<1x1x8x8xf32, #tpu.memory_space<vmem>>, vector<1x1x1x8xf32>
    %7 = vector.shape_cast %6 : vector<1x1x1x8xf32> to vector<1x8xf32>
    %c0_12 = arith.constant 0 : index
    %c0_13 = arith.constant 0 : index
    %c4 = arith.constant 4 : index
    %c0_14 = arith.constant 0 : index
    %8 = vector.load %arg3[%c0_12, %c0_13, %c4, %c0_14] : memref<1x1x8x8xf32, #tpu.memory_space<vmem>>, vector<1x1x1x8xf32>
    %9 = vector.shape_cast %8 : vector<1x1x1x8xf32> to vector<1x8xf32>
    %c0_15 = arith.constant 0 : index
    %c0_16 = arith.constant 0 : index
    %c5 = arith.constant 5 : index
    %c0_17 = arith.constant 0 : index
    %10 = vector.load %arg3[%c0_15, %c0_16, %c5, %c0_17] : memref<1x1x8x8xf32, #tpu.memory_space<vmem>>, vector<1x1x1x8xf32>
    %11 = vector.shape_cast %10 : vector<1x1x1x8xf32> to vector<1x8xf32>
    %c0_18 = arith.constant 0 : index
    %c0_19 = arith.constant 0 : index
    %c6 = arith.constant 6 : index
    %c0_20 = arith.constant 0 : index
    %12 = vector.load %arg3[%c0_18, %c0_19, %c6, %c0_20] : memref<1x1x8x8xf32, #tpu.memory_space<vmem>>, vector<1x1x1x8xf32>
    %13 = vector.shape_cast %12 : vector<1x1x1x8xf32> to vector<1x8xf32>
    %c0_21 = arith.constant 0 : index
    %c0_22 = arith.constant 0 : index
    %c7 = arith.constant 7 : index
    %c0_23 = arith.constant 0 : index
    %14 = vector.load %arg3[%c0_21, %c0_22, %c7, %c0_23] : memref<1x1x8x8xf32, #tpu.memory_space<vmem>>, vector<1x1x1x8xf32>
    %15 = vector.shape_cast %14 : vector<1x1x1x8xf32> to vector<1x8xf32>
    %16 = tpu.concatenate %1, %3, %5, %7, %9, %11, %13, %15 in 1 : vector<1x8xf32>, vector<1x8xf32>, vector<1x8xf32>, vector<1x8xf32>, vector<1x8xf32>, vector<1x8xf32>, vector<1x8xf32>, vector<1x8xf32> -> vector<1x64xf32>
    %c0_24 = arith.constant 0 : index
    %c0_25 = arith.constant 0 : index
    %17 = vector.load %arg4[%c0_24, %c0_25] : memref<64x64xf32, #tpu.memory_space<vmem>>, vector<64x64xf32>
    %cst = arith.constant dense<0.000000e+00> : vector<1x64xf32>
    %18 = tpu.matmul %16, %17, %cst {dimension_numbers = #tpu.dot_dimension_numbers<[1], [0], [0], [1], [0, 0, 1, 1], [], []>} : vector<1x64xf32>, vector<64x64xf32>, vector<1x64xf32> -> vector<1x64xf32>
    %19 = math.roundeven %18 : vector<1x64xf32>
    %c0_26 = arith.constant 0 : index
    %c0_27 = arith.constant 0 : index
    %c0_28 = arith.constant 0 : index
    %20 = vector.load %arg5[%c0_26, %c0_27, %c0_28] : memref<1x1x64xf32, #tpu.memory_space<vmem>>, vector<1x1x64xf32>
    %21 = vector.shape_cast %20 : vector<1x1x64xf32> to vector<1x64xf32>
    %22 = vector.shape_cast %19 : vector<1x64xf32> to vector<1x1x64xf32>
    tpu.vector_store %arg5[%c0_26, %c0_27, %c0_28], %22 {strides = array<i32>} : memref<1x1x64xf32, #tpu.memory_space<vmem>>, vector<1x1x64xf32>,
    return
  }
  func.func @transform_0(%arg0: i32, %arg1: i32, %arg2: i32) -> (i32, i32, i32, i32) {
    %c0_i32 = arith.constant 0 : i32
    %c0_i32_0 = arith.constant 0 : i32
    return %arg0, %arg1, %c0_i32, %arg2 : i32, i32, i32, i32
  }
  func.func @transform_1(%arg0: i32, %arg1: i32, %arg2: i32) -> (i32, i32) {
    %c0_i32 = arith.constant 0 : i32
    %c0_i32_0 = arith.constant 0 : i32
    %c0_i32_1 = arith.constant 0 : i32
    return %c0_i32, %c0_i32_0 : i32, i32
  }
  func.func @transform_2(%arg0: i32, %arg1: i32, %arg2: i32) -> (i32, i32, i32) {
    %c0_i32 = arith.constant 0 : i32
    return %arg0, %arg1, %arg2 : i32, i32, i32
  }
}

module attributes {stable_mosaic.version = 11 : i64} {
  func.func @rgb_ycc_sub_kernel(%arg0: i32, %arg1: i32, %arg2: i32, %arg3: memref<1x3x16x16xf32, #tpu.memory_space<vmem>>, %arg4: memref<8x16xf32, #tpu.memory_space<vmem>>, %arg5: memref<16x8xf32, #tpu.memory_space<vmem>>, %arg6: memref<1x16x16xf32, #tpu.memory_space<vmem>>, %arg7: memref<1x8x8xf32, #tpu.memory_space<vmem>>, %arg8: memref<1x8x8xf32, #tpu.memory_space<vmem>>) attributes {dimension_semantics = [#tpu.dimension_semantics<parallel>, #tpu.dimension_semantics<parallel>, #tpu.dimension_semantics<parallel>], iteration_bounds = array<i64: 2, 1, 1>, scalar_prefetch = 0 : i64, scratch_operands = 0 : i64, tpu.core_type = #tpu.core_type<tc>, window_params = [{transform_indices = @transform_0, window_bounds = array<i64: 1, 3, 16, 16>}, {pipeline_mode = #tpu.pipeline_mode<synchronous>, transform_indices = @transform_1, window_bounds = array<i64: 8, 16>}, {pipeline_mode = #tpu.pipeline_mode<synchronous>, transform_indices = @transform_2, window_bounds = array<i64: 16, 8>}, {transform_indices = @transform_3, window_bounds = array<i64: 1, 16, 16>}, {transform_indices = @transform_4, window_bounds = array<i64: 1, 8, 8>}, {transform_indices = @transform_5, window_bounds = array<i64: 1, 8, 8>}]} {
    %c0 = arith.constant 0 : index
    %c0_0 = arith.constant 0 : index
    %c0_1 = arith.constant 0 : index
    %c0_2 = arith.constant 0 : index
    %0 = vector.load %arg3[%c0, %c0_0, %c0_1, %c0_2] : memref<1x3x16x16xf32, #tpu.memory_space<vmem>>, vector<1x1x16x16xf32>
    %1 = vector.shape_cast %0 : vector<1x1x16x16xf32> to vector<16x16xf32>
    %c0_3 = arith.constant 0 : index
    %c1 = arith.constant 1 : index
    %c0_4 = arith.constant 0 : index
    %c0_5 = arith.constant 0 : index
    %2 = vector.load %arg3[%c0_3, %c1, %c0_4, %c0_5] : memref<1x3x16x16xf32, #tpu.memory_space<vmem>>, vector<1x1x16x16xf32>
    %3 = vector.shape_cast %2 : vector<1x1x16x16xf32> to vector<16x16xf32>
    %c0_6 = arith.constant 0 : index
    %c2 = arith.constant 2 : index
    %c0_7 = arith.constant 0 : index
    %c0_8 = arith.constant 0 : index
    %4 = vector.load %arg3[%c0_6, %c2, %c0_7, %c0_8] : memref<1x3x16x16xf32, #tpu.memory_space<vmem>>, vector<1x1x16x16xf32>
    %5 = vector.shape_cast %4 : vector<1x1x16x16xf32> to vector<16x16xf32>
    %cst = arith.constant 7.624500e+01 : f32
    %6 = vector.broadcast %cst : f32 to vector<16x16xf32>
    %7 = arith.mulf %6, %1 : vector<16x16xf32>
    %cst_9 = arith.constant 1.496850e+02 : f32
    %8 = vector.broadcast %cst_9 : f32 to vector<16x16xf32>
    %9 = arith.mulf %8, %3 : vector<16x16xf32>
    %10 = arith.addf %7, %9 : vector<16x16xf32>
    %cst_10 = arith.constant 2.907000e+01 : f32
    %11 = vector.broadcast %cst_10 : f32 to vector<16x16xf32>
    %12 = arith.mulf %11, %5 : vector<16x16xf32>
    %13 = arith.addf %10, %12 : vector<16x16xf32>
    %cst_11 = arith.constant 1.280000e+02 : f32
    %14 = vector.broadcast %cst_11 : f32 to vector<16x16xf32>
    %15 = arith.subf %13, %14 : vector<16x16xf32>
    %c0_12 = arith.constant 0 : index
    %c0_13 = arith.constant 0 : index
    %c0_14 = arith.constant 0 : index
    %16 = vector.load %arg6[%c0_12, %c0_13, %c0_14] : memref<1x16x16xf32, #tpu.memory_space<vmem>>, vector<1x16x16xf32>
    %17 = vector.shape_cast %16 : vector<1x16x16xf32> to vector<16x16xf32>
    %18 = vector.shape_cast %15 : vector<16x16xf32> to vector<1x16x16xf32>
    tpu.vector_store %arg6[%c0_12, %c0_13, %c0_14], %18 {strides = array<i32>} : memref<1x16x16xf32, #tpu.memory_space<vmem>>, vector<1x16x16xf32>,
    %cst_15 = arith.constant -43.0276794 : f32
    %19 = vector.broadcast %cst_15 : f32 to vector<16x16xf32>
    %20 = arith.mulf %19, %1 : vector<16x16xf32>
    %cst_16 = arith.constant -84.4723205 : f32
    %21 = vector.broadcast %cst_16 : f32 to vector<16x16xf32>
    %22 = arith.mulf %21, %3 : vector<16x16xf32>
    %23 = arith.addf %20, %22 : vector<16x16xf32>
    %cst_17 = arith.constant 1.275000e+02 : f32
    %24 = vector.broadcast %cst_17 : f32 to vector<16x16xf32>
    %25 = arith.mulf %24, %5 : vector<16x16xf32>
    %26 = arith.addf %23, %25 : vector<16x16xf32>
    %cst_18 = arith.constant 1.275000e+02 : f32
    %27 = vector.broadcast %cst_18 : f32 to vector<16x16xf32>
    %28 = arith.mulf %27, %1 : vector<16x16xf32>
    %cst_19 = arith.constant -106.765442 : f32
    %29 = vector.broadcast %cst_19 : f32 to vector<16x16xf32>
    %30 = arith.mulf %29, %3 : vector<16x16xf32>
    %31 = arith.addf %28, %30 : vector<16x16xf32>
    %cst_20 = arith.constant -20.73456 : f32
    %32 = vector.broadcast %cst_20 : f32 to vector<16x16xf32>
    %33 = arith.mulf %32, %5 : vector<16x16xf32>
    %34 = arith.addf %31, %33 : vector<16x16xf32>
    %c0_21 = arith.constant 0 : index
    %c0_22 = arith.constant 0 : index
    %35 = vector.load %arg4[%c0_21, %c0_22] : memref<8x16xf32, #tpu.memory_space<vmem>>, vector<8x16xf32>
    %c0_23 = arith.constant 0 : index
    %c0_24 = arith.constant 0 : index
    %36 = vector.load %arg5[%c0_23, %c0_24] : memref<16x8xf32, #tpu.memory_space<vmem>>, vector<16x8xf32>
    %cst_25 = arith.constant dense<0.000000e+00> : vector<8x16xf32>
    %37 = tpu.matmul %35, %26, %cst_25 {dimension_numbers = #tpu.dot_dimension_numbers<[1], [0], [0], [1], [0, 0, 1, 1], [], []>} : vector<8x16xf32>, vector<16x16xf32>, vector<8x16xf32> -> vector<8x16xf32>
    %cst_26 = arith.constant dense<0.000000e+00> : vector<8x8xf32>
    %38 = tpu.matmul %37, %36, %cst_26 {dimension_numbers = #tpu.dot_dimension_numbers<[1], [0], [0], [1], [0, 0, 1, 1], [], []>} : vector<8x16xf32>, vector<16x8xf32>, vector<8x8xf32> -> vector<8x8xf32>
    %c0_27 = arith.constant 0 : index
    %c0_28 = arith.constant 0 : index
    %c0_29 = arith.constant 0 : index
    %39 = vector.load %arg7[%c0_27, %c0_28, %c0_29] : memref<1x8x8xf32, #tpu.memory_space<vmem>>, vector<1x8x8xf32>
    %40 = vector.shape_cast %39 : vector<1x8x8xf32> to vector<8x8xf32>
    %41 = vector.shape_cast %38 : vector<8x8xf32> to vector<1x8x8xf32>
    tpu.vector_store %arg7[%c0_27, %c0_28, %c0_29], %41 {strides = array<i32>} : memref<1x8x8xf32, #tpu.memory_space<vmem>>, vector<1x8x8xf32>,
    %cst_30 = arith.constant dense<0.000000e+00> : vector<8x16xf32>
    %42 = tpu.matmul %35, %34, %cst_30 {dimension_numbers = #tpu.dot_dimension_numbers<[1], [0], [0], [1], [0, 0, 1, 1], [], []>} : vector<8x16xf32>, vector<16x16xf32>, vector<8x16xf32> -> vector<8x16xf32>
    %cst_31 = arith.constant dense<0.000000e+00> : vector<8x8xf32>
    %43 = tpu.matmul %42, %36, %cst_31 {dimension_numbers = #tpu.dot_dimension_numbers<[1], [0], [0], [1], [0, 0, 1, 1], [], []>} : vector<8x16xf32>, vector<16x8xf32>, vector<8x8xf32> -> vector<8x8xf32>
    %c0_32 = arith.constant 0 : index
    %c0_33 = arith.constant 0 : index
    %c0_34 = arith.constant 0 : index
    %44 = vector.load %arg8[%c0_32, %c0_33, %c0_34] : memref<1x8x8xf32, #tpu.memory_space<vmem>>, vector<1x8x8xf32>
    %45 = vector.shape_cast %44 : vector<1x8x8xf32> to vector<8x8xf32>
    %46 = vector.shape_cast %43 : vector<8x8xf32> to vector<1x8x8xf32>
    tpu.vector_store %arg8[%c0_32, %c0_33, %c0_34], %46 {strides = array<i32>} : memref<1x8x8xf32, #tpu.memory_space<vmem>>, vector<1x8x8xf32>,
    return
  }
  func.func @transform_0(%arg0: i32, %arg1: i32, %arg2: i32) -> (i32, i32, i32, i32) {
    %c0_i32 = arith.constant 0 : i32
    %c0_i32_0 = arith.constant 0 : i32
    return %arg0, %c0_i32, %arg1, %arg2 : i32, i32, i32, i32
  }
  func.func @transform_1(%arg0: i32, %arg1: i32, %arg2: i32) -> (i32, i32) {
    %c0_i32 = arith.constant 0 : i32
    %c0_i32_0 = arith.constant 0 : i32
    %c0_i32_1 = arith.constant 0 : i32
    return %c0_i32, %c0_i32_0 : i32, i32
  }
  func.func @transform_2(%arg0: i32, %arg1: i32, %arg2: i32) -> (i32, i32) {
    %c0_i32 = arith.constant 0 : i32
    %c0_i32_0 = arith.constant 0 : i32
    %c0_i32_1 = arith.constant 0 : i32
    return %c0_i32, %c0_i32_0 : i32, i32
  }
  func.func @transform_3(%arg0: i32, %arg1: i32, %arg2: i32) -> (i32, i32, i32) {
    %c0_i32 = arith.constant 0 : i32
    return %arg0, %arg1, %arg2 : i32, i32, i32
  }
  func.func @transform_4(%arg0: i32, %arg1: i32, %arg2: i32) -> (i32, i32, i32) {
    %c0_i32 = arith.constant 0 : i32
    return %arg0, %arg1, %arg2 : i32, i32, i32
  }
  func.func @transform_5(%arg0: i32, %arg1: i32, %arg2: i32) -> (i32, i32, i32) {
    %c0_i32 = arith.constant 0 : i32
    return %arg0, %arg1, %arg2 : i32, i32, i32
  }
}

module attributes {stable_mosaic.version = 11 : i64} {
  func.func @dct_pack_kernel(%arg0: i32, %arg1: i32, %arg2: i32, %arg3: memref<1x2x8x16xf32, #tpu.memory_space<vmem>>, %arg4: memref<128x128xf32, #tpu.memory_space<vmem>>, %arg5: memref<1x2x128xf32, #tpu.memory_space<vmem>>) attributes {dimension_semantics = [#tpu.dimension_semantics<parallel>, #tpu.dimension_semantics<parallel>, #tpu.dimension_semantics<parallel>], iteration_bounds = array<i64: 2, 1, 1>, scalar_prefetch = 0 : i64, scratch_operands = 0 : i64, tpu.core_type = #tpu.core_type<tc>, window_params = [{transform_indices = @transform_0, window_bounds = array<i64: 1, 2, 8, 16>}, {pipeline_mode = #tpu.pipeline_mode<synchronous>, transform_indices = @transform_1, window_bounds = array<i64: 128, 128>}, {transform_indices = @transform_2, window_bounds = array<i64: 1, 2, 128>}]} {
    %c0 = arith.constant 0 : index
    %c0_0 = arith.constant 0 : index
    %c0_1 = arith.constant 0 : index
    %c0_2 = arith.constant 0 : index
    %0 = vector.load %arg3[%c0, %c0_0, %c0_1, %c0_2] : memref<1x2x8x16xf32, #tpu.memory_space<vmem>>, vector<1x2x1x16xf32>
    %1 = vector.shape_cast %0 : vector<1x2x1x16xf32> to vector<2x16xf32>
    %c0_3 = arith.constant 0 : index
    %c0_4 = arith.constant 0 : index
    %c1 = arith.constant 1 : index
    %c0_5 = arith.constant 0 : index
    %2 = vector.load %arg3[%c0_3, %c0_4, %c1, %c0_5] : memref<1x2x8x16xf32, #tpu.memory_space<vmem>>, vector<1x2x1x16xf32>
    %3 = vector.shape_cast %2 : vector<1x2x1x16xf32> to vector<2x16xf32>
    %c0_6 = arith.constant 0 : index
    %c0_7 = arith.constant 0 : index
    %c2 = arith.constant 2 : index
    %c0_8 = arith.constant 0 : index
    %4 = vector.load %arg3[%c0_6, %c0_7, %c2, %c0_8] : memref<1x2x8x16xf32, #tpu.memory_space<vmem>>, vector<1x2x1x16xf32>
    %5 = vector.shape_cast %4 : vector<1x2x1x16xf32> to vector<2x16xf32>
    %c0_9 = arith.constant 0 : index
    %c0_10 = arith.constant 0 : index
    %c3 = arith.constant 3 : index
    %c0_11 = arith.constant 0 : index
    %6 = vector.load %arg3[%c0_9, %c0_10, %c3, %c0_11] : memref<1x2x8x16xf32, #tpu.memory_space<vmem>>, vector<1x2x1x16xf32>
    %7 = vector.shape_cast %6 : vector<1x2x1x16xf32> to vector<2x16xf32>
    %c0_12 = arith.constant 0 : index
    %c0_13 = arith.constant 0 : index
    %c4 = arith.constant 4 : index
    %c0_14 = arith.constant 0 : index
    %8 = vector.load %arg3[%c0_12, %c0_13, %c4, %c0_14] : memref<1x2x8x16xf32, #tpu.memory_space<vmem>>, vector<1x2x1x16xf32>
    %9 = vector.shape_cast %8 : vector<1x2x1x16xf32> to vector<2x16xf32>
    %c0_15 = arith.constant 0 : index
    %c0_16 = arith.constant 0 : index
    %c5 = arith.constant 5 : index
    %c0_17 = arith.constant 0 : index
    %10 = vector.load %arg3[%c0_15, %c0_16, %c5, %c0_17] : memref<1x2x8x16xf32, #tpu.memory_space<vmem>>, vector<1x2x1x16xf32>
    %11 = vector.shape_cast %10 : vector<1x2x1x16xf32> to vector<2x16xf32>
    %c0_18 = arith.constant 0 : index
    %c0_19 = arith.constant 0 : index
    %c6 = arith.constant 6 : index
    %c0_20 = arith.constant 0 : index
    %12 = vector.load %arg3[%c0_18, %c0_19, %c6, %c0_20] : memref<1x2x8x16xf32, #tpu.memory_space<vmem>>, vector<1x2x1x16xf32>
    %13 = vector.shape_cast %12 : vector<1x2x1x16xf32> to vector<2x16xf32>
    %c0_21 = arith.constant 0 : index
    %c0_22 = arith.constant 0 : index
    %c7 = arith.constant 7 : index
    %c0_23 = arith.constant 0 : index
    %14 = vector.load %arg3[%c0_21, %c0_22, %c7, %c0_23] : memref<1x2x8x16xf32, #tpu.memory_space<vmem>>, vector<1x2x1x16xf32>
    %15 = vector.shape_cast %14 : vector<1x2x1x16xf32> to vector<2x16xf32>
    %16 = tpu.concatenate %1, %3, %5, %7, %9, %11, %13, %15 in 1 : vector<2x16xf32>, vector<2x16xf32>, vector<2x16xf32>, vector<2x16xf32>, vector<2x16xf32>, vector<2x16xf32>, vector<2x16xf32>, vector<2x16xf32> -> vector<2x128xf32>
    %c0_24 = arith.constant 0 : index
    %c0_25 = arith.constant 0 : index
    %17 = vector.load %arg4[%c0_24, %c0_25] : memref<128x128xf32, #tpu.memory_space<vmem>>, vector<128x128xf32>
    %cst = arith.constant dense<0.000000e+00> : vector<2x128xf32>
    %18 = tpu.matmul %16, %17, %cst {dimension_numbers = #tpu.dot_dimension_numbers<[1], [0], [0], [1], [0, 0, 1, 1], [], []>} : vector<2x128xf32>, vector<128x128xf32>, vector<2x128xf32> -> vector<2x128xf32>
    %19 = math.roundeven %18 : vector<2x128xf32>
    %c0_26 = arith.constant 0 : index
    %c0_27 = arith.constant 0 : index
    %c0_28 = arith.constant 0 : index
    %20 = vector.load %arg5[%c0_26, %c0_27, %c0_28] : memref<1x2x128xf32, #tpu.memory_space<vmem>>, vector<1x2x128xf32>
    %21 = vector.shape_cast %20 : vector<1x2x128xf32> to vector<2x128xf32>
    %22 = vector.shape_cast %19 : vector<2x128xf32> to vector<1x2x128xf32>
    tpu.vector_store %arg5[%c0_26, %c0_27, %c0_28], %22 {strides = array<i32>} : memref<1x2x128xf32, #tpu.memory_space<vmem>>, vector<1x2x128xf32>,
    return
  }
  func.func @transform_0(%arg0: i32, %arg1: i32, %arg2: i32) -> (i32, i32, i32, i32) {
    %c0_i32 = arith.constant 0 : i32
    %c0_i32_0 = arith.constant 0 : i32
    return %arg0, %arg1, %c0_i32, %arg2 : i32, i32, i32, i32
  }
  func.func @transform_1(%arg0: i32, %arg1: i32, %arg2: i32) -> (i32, i32) {
    %c0_i32 = arith.constant 0 : i32
    %c0_i32_0 = arith.constant 0 : i32
    %c0_i32_1 = arith.constant 0 : i32
    return %c0_i32, %c0_i32_0 : i32, i32
  }
  func.func @transform_2(%arg0: i32, %arg1: i32, %arg2: i32) -> (i32, i32, i32) {
    %c0_i32 = arith.constant 0 : i32
    return %arg0, %arg1, %arg2 : i32, i32, i32
  }
}

</mosaic_0001>

<llo_original>
// kernel: compress_jpeg.6
$region0: #{compress_jpeg.6}
  #allocation0 [shape = 'u32[]', space=smem, size = 0x4, offset = 0x4, fixed_abs, tag = 'smem constant byte address 0x4 - core index']
  #allocation1 [shape = 'u32[144,128]{1,0:T(1,128)}', space=vmem, size = 0x12000, scoped, tag = 'internal scratch']
  %s0 = inlined_call_operand.vmem [shape: f32[2,1,8,8], index: 0, kind: input, shape index: {}]
  %s1 = inlined_call_operand.vmem [shape: f32[64,64], index: 1, kind: input, shape index: {}]
  %s2 = inlined_call_operand.vmem [shape: f32[2,1,64], index: 2, kind: output, shape index: {}]
  %s3 = sld [smem:[#allocation0]]
  $region41: #{compress_jpeg.6} parent=0
    _
  %s5 = ssub.s32 1, %s3
  %s6 = scalar_select 0, %s5, %s3
  loop: start=0, step=1, limit=4
  $region2: #{compress_jpeg.6} parent=0 // loop_pre_header
    _
  $region3: #{compress_jpeg.6} parent=0 // loop_header
    %s8 = sphi 0, %s12
    %p9 = scmp.ge.s32.totalorder %s8, 4
    %s15 = sphi 0, %s34
    %s16 = sphi 0, %s30
    %s17 = sphi 0, %s26
    %s18 = sphi 0, %s15
    %s19 = sphi 0, %s16
    %s20 = sphi 0, %s17
    %s21 = sphi 0, %s18
    %s22 = sphi 0, %s19
    %s23 = sphi 0, %s20
    %s41 = sphi 0, %s43
    %s44 = sphi 0, %s41
    %s45 = sphi 0, %s44
    %s61 = sphi 0, %s45
    %s65 = sphi 0, %s65
    %s67 = sphi 0, %s65
    %s68 = sphi 0, %s67
    %s82 = sphi 0, %s68
    %s92 = sphi 0, %s94
    %s95 = sphi 0, %s92
    %s96 = sphi 0, %s95
    %s112 = sphi 0, %s96
  $region4: #{compress_jpeg.6} parent=0 // loop_header_branch
    %11 = sbr.rel (%p9) target = $region8
  $region5: #{compress_jpeg.6} parent=0 // loop_body
    %s13 = ssub.s32 %s8, 1
    %s14 = ssub.s32 %s8, 2
    %s24 = sadd.s32 1, %s17
    %p25 = scmp.ge.s32.totalorder %s24, 1
    %s26 = scalar_select %p25, 0, %s24
    %s27 = sadd.s32 1, %s16
    %s28 = scalar_select %p25, %s27, %s16
    %p29 = scmp.ge.s32.totalorder %s28, 1
    %s30 = scalar_select %p29, 0, %s28
    %s31 = sadd.s32 1, %s15
    %s32 = scalar_select %p29, %s31, %s15
    %p33 = scmp.ge.s32.totalorder %s32, 2
    %s34 = scalar_select %p33, 0, %s32
    %s35 = ssub.s32 %s15, %s34
    %s36 = ssub.s32 %s16, %s30
    %s37 = sor.u32 %s35, %s36
    %s38 = ssub.s32 %s17, %s26
    %s39 = sor.u32 %s37, %s38
    %p40 = scmp.eq.s32.totalorder %s39, 0
    %s42 = sadd.s32 %s41, 1
    %s43 = scalar_select %p40, %s41, %s42
    %p46 = pneg %p40
    %p47 = scmp.eq.s32.totalorder %s8, 1
    %p48 = por %p46, %p47
    %p49 = scmp.ne.s32.totalorder %s41, %s44
    %p50 = scmp.eq.s32.totalorder %s8, 0
    %p51 = por %p49, %p50
    %p52 = scmp.ne.s32.totalorder %s41, %s44
    %p53 = scmp.eq.s32.totalorder %s13, 1
    %p54 = por %p52, %p53
    %p55 = scmp.ne.s32.totalorder %s44, %s45
    %p56 = scmp.eq.s32.totalorder %s13, 0
    %p57 = por %p55, %p56
    %p58 = scmp.ne.s32.totalorder %s44, %s45
    %p59 = scmp.eq.s32.totalorder %s14, 1
    %p60 = por %p58, %p59
    %p62 = scmp.ne.s32.totalorder %s45, %s61
    %p63 = scmp.eq.s32.totalorder %s14, 0
    %p64 = por %p62, %p63
    %s66 = sadd.s32 %s65, 1
    %p69 = scmp.eq.s32.totalorder %s8, 1
    %p70 = scmp.ne.s32.totalorder %s65, %s67
    %p71 = scmp.eq.s32.totalorder %s8, 0
    %p72 = por %p70, %p71
    %p73 = scmp.ne.s32.totalorder %s65, %s67
    %p74 = scmp.eq.s32.totalorder %s13, 1
    %p75 = por %p73, %p74
    %p76 = scmp.ne.s32.totalorder %s67, %s68
    %p77 = scmp.eq.s32.totalorder %s13, 0
    %p78 = por %p76, %p77
    %p79 = scmp.ne.s32.totalorder %s67, %s68
    %p80 = scmp.eq.s32.totalorder %s14, 1
    %p81 = por %p79, %p80
    %p83 = scmp.ne.s32.totalorder %s68, %s82
    %p84 = scmp.eq.s32.totalorder %s14, 0
    %p85 = por %p83, %p84
    %s86 = ssub.s32 %s15, %s34
    %s87 = ssub.s32 %s16, %s30
    %s88 = sor.u32 %s86, %s87
    %s89 = ssub.s32 %s17, %s26
    %s90 = sor.u32 %s88, %s89
    %p91 = scmp.eq.s32.totalorder %s90, 0
    %s93 = sadd.s32 %s92, 1
    %s94 = scalar_select %p91, %s92, %s93
    %p97 = pneg %p91
    %p98 = scmp.eq.s32.totalorder %s8, 1
    %p99 = por %p97, %p98
    %p100 = scmp.ne.s32.totalorder %s92, %s95
    %p101 = scmp.eq.s32.totalorder %s8, 0
    %p102 = por %p100, %p101
    %p103 = scmp.ne.s32.totalorder %s92, %s95
    %p104 = scmp.eq.s32.totalorder %s13, 1
    %p105 = por %p103, %p104
    %p106 = scmp.ne.s32.totalorder %s95, %s96
    %p107 = scmp.eq.s32.totalorder %s13, 0
    %p108 = por %p106, %p107
    %p109 = scmp.ne.s32.totalorder %s95, %s96
    %p110 = scmp.eq.s32.totalorder %s14, 1
    %p111 = por %p109, %p110
    %p113 = scmp.ne.s32.totalorder %s96, %s112
    %p114 = scmp.eq.s32.totalorder %s14, 0
    %p115 = por %p113, %p114
    %p116 = scmp.le.s32.totalorder 1, %s8
    %p117 = scmp.lt.s32.totalorder %s8, 3
    %p118 = pnand %p116, %p117
    %p119 = pneg %p118
    // Predicated region
    $region9: #{compress_jpeg.6} parent=5 // pred_check
      _
    $region10: #{compress_jpeg.6} parent=5 // pred_check_branch
      %121 = sbr.rel (%p118) target = $region12
    $region11: #{compress_jpeg.6} parent=5 // pred_region
      %s122 = ssub.s32 %s8, 1
      // Predicated region
      $region13: #{compress_jpeg.6} parent=11 // pred_check
        %p123 = pneg %p78
      $region14: #{compress_jpeg.6} parent=11 // pred_check_branch
        %125 = sbr.rel (%p123) target = $region16
      $region15: #{compress_jpeg.6} parent=11 // pred_region
        _
      $region16: #{compress_jpeg.6} parent=11 // pred_fallthru
        _
    $region12: #{compress_jpeg.6} parent=5 // pred_fallthru
      _
    %p126 = scmp.lt.s32.totalorder %s8, 2
    // Predicated region
    $region17: #{compress_jpeg.6} parent=5 // pred_check
      %p127 = pneg %p126
    $region18: #{compress_jpeg.6} parent=5 // pred_check_branch
      %129 = sbr.rel (%p127) target = $region20
    $region19: #{compress_jpeg.6} parent=5 // pred_region
      // Predicated region
      $region21: #{compress_jpeg.6} parent=19 // pred_check
        %p130 = pneg %p51
      $region22: #{compress_jpeg.6} parent=19 // pred_check_branch
        %132 = sbr.rel (%p130) target = $region24
      $region23: #{compress_jpeg.6} parent=19 // pred_region
        %p133 = scmp.lt.s32.totalorder %s15, 1
        %s134 = scalar_select %p133, %s15, 1
        %p135 = scmp.lt.s32.totalorder %s16, 0
        %s136 = scalar_select %p135, %s16, 0
        %p137 = scmp.lt.s32.totalorder %s17, 0
        %s138 = scalar_select %p137, %s17, 0
        %s139 = sadd.s32 %s138, %s136
        %s140 = sadd.s32 %s139, %s134
        %s141 = smul.addr %s140, 8
        %s142 = scalar_lea.vmem %s0, %s141
      $region24: #{compress_jpeg.6} parent=19 // pred_fallthru
        _
    $region20: #{compress_jpeg.6} parent=5 // pred_fallthru
      _
    %p143 = scmp.le.s32.totalorder 1, %s8
    %p144 = scmp.lt.s32.totalorder %s8, 3
    %p145 = pnand %p143, %p144
    %p146 = pneg %p145
    // Predicated region
    $region25: #{compress_jpeg.6} parent=5 // pred_check
      _
    $region26: #{compress_jpeg.6} parent=5 // pred_check_branch
      %148 = sbr.rel (%p145) target = $region28
    $region27: #{compress_jpeg.6} parent=5 // pred_region
      %s149 = ssub.s32 %s8, 1
      %p150 = scmp.lt.s32.totalorder %s18, 1
      %s151 = scalar_select %p150, %s18, 1
      %p152 = scmp.lt.s32.totalorder %s19, 0
      %s153 = scalar_select %p152, %s19, 0
      %p154 = scmp.lt.s32.totalorder %s20, 0
      %s155 = scalar_select %p154, %s20, 0
      %s156 = sadd.s32 %s155, %s153
      %s157 = sadd.s32 %s156, %s151
      %s158 = smul.addr %s157, 8
      %s159 = scalar_lea.vmem %s0, %s158
      %p160 = pneg %p57
      %p161 = pneg %p54
      %p162 = pneg %p78
      %p163 = pneg %p75
      %p164 = pneg %p108
      %p165 = pneg %p105
      %p166 = scmp.lt.s32.totalorder %s18, 1
      %s167 = scalar_select %p166, %s18, 1
      %p168 = scmp.lt.s32.totalorder %s19, 0
      %s169 = scalar_select %p168, %s19, 0
      %p170 = scmp.lt.s32.totalorder %s20, 0
      %s171 = scalar_select %p170, %s20, 0
      %s172 = sadd.s32 %s171, %s169
      %s173 = sadd.s32 %s172, %s167
      %s174 = scalar_lea.vmem %s2, %s173
      %p175 = scmp.lt.s32.totalorder %s18, 1
      %s176 = scalar_select %p175, %s18, 1
      %p177 = scmp.lt.s32.totalorder %s19, 0
      %s178 = scalar_select %p177, %s19, 0
      %p179 = scmp.lt.s32.totalorder %s20, 0
      %s180 = scalar_select %p179, %s20, 0
      %s181 = sadd.s32 %s180, %s178
      %s182 = sadd.s32 %s181, %s176
      %s183 = smul.addr %s182, 8
      %s184 = scalar_lea.vmem %s0, %s183
      %p185 = scmp.lt.s32.totalorder %s18, 1
      %s186 = scalar_select %p185, %s18, 1
      %p187 = scmp.lt.s32.totalorder %s19, 0
      %s188 = scalar_select %p187, %s19, 0
      %p189 = scmp.lt.s32.totalorder %s20, 0
      %s190 = scalar_select %p189, %s20, 0
      %s191 = sadd.s32 %s190, %s188
      %s192 = sadd.s32 %s191, %s186
      %s193 = scalar_lea.vmem %s2, %s192
      %v194 = vld [vmem:[%s184] sm:$0x1]
      %v195 = vld [vmem:[%s184 + $0x1] sm:$0x1]
      %v196 = vld [vmem:[%s184 + $0x2] sm:$0x1]
      %v197 = vld [vmem:[%s184 + $0x3] sm:$0x1]
      %v198 = vld [vmem:[%s184 + $0x4] sm:$0x1]
      %v199 = vld [vmem:[%s184 + $0x5] sm:$0x1]
      %v200 = vld [vmem:[%s184 + $0x6] sm:$0x1]
      %v201 = vld [vmem:[%s184 + $0x7] sm:$0x1]
      %203 = vrot.lane.b32.xlu0 %v195, 8
      %v204 = vpop.permute.xlu0 %203
      %207 = vrot.lane.b32.xlu0 %v196, 16
      %v208 = vpop.permute.xlu0 %207
      %211 = vrot.lane.b32.xlu0 %v197, 24
      %v212 = vpop.permute.xlu0 %211
      %215 = vrot.lane.b32.xlu0 %v198, 32
      %v216 = vpop.permute.xlu0 %215
      %219 = vrot.lane.b32.xlu0 %v199, 40
      %v220 = vpop.permute.xlu0 %219
      %223 = vrot.lane.b32.xlu0 %v200, 48
      %v224 = vpop.permute.xlu0 %223
      %227 = vrot.lane.b32.xlu0 %v201, 56
      %v228 = vpop.permute.xlu0 %227
      %vm230 = vcmask 64512
      %v231 = vsel %vm230, %v194, %v204
      %vm232 = vcmask 130048
      %v233 = vsel %vm232, %v231, %v208
      %vm234 = vcmask 195584
      %v235 = vsel %vm234, %v233, %v212
      %vm236 = vcmask 261120
      %v237 = vsel %vm236, %v235, %v216
      %vm238 = vcmask 326656
      %v239 = vsel %vm238, %v237, %v220
      %vm240 = vcmask 392192
      %v241 = vsel %vm240, %v239, %v224
      %vm242 = vcmask 457728
      %v243 = vsel %vm242, %v241, %v228
      %v244 = vld [vmem:[%s1] sm:$0xff]
      %v245 = vld [vmem:[%s1 + $0x8] sm:$0xff]
      %v246 = vld [vmem:[%s1 + $0x10] sm:$0xff]
      %v247 = vld [vmem:[%s1 + $0x18] sm:$0xff]
      %v248 = vld [vmem:[%s1 + $0x20] sm:$0xff]
      %v249 = vld [vmem:[%s1 + $0x28] sm:$0xff]
      %v250 = vld [vmem:[%s1 + $0x30] sm:$0xff]
      %v251 = vld [vmem:[%s1 + $0x38] sm:$0xff]
      %vm252 = vcmask 523264
      %v254 = vsel %vm252, %v243, 0
      %256 = vmatprep.subr.mxu0 0.0
      %257 = vmatpush1.msra.mxu0 %v244
      %258 = vmatprep.subr.mxu0 0.0
      %259 = vmatpush1.msra.mxu0 %v245
      %260 = vmatprep.subr.mxu0 0.0
      %261 = vmatpush1.msra.mxu0 %v246
      %262 = vmatprep.subr.mxu0 0.0
      %263 = vmatpush1.msra.mxu0 %v247
      %264 = vmatprep.subr.mxu0 0.0
      %265 = vmatpush1.msra.mxu0 %v248
      %266 = vmatprep.subr.mxu0 0.0
      %267 = vmatpush1.msra.mxu0 %v249
      %268 = vmatprep.subr.mxu0 0.0
      %269 = vmatpush1.msra.mxu0 %v250
      %270 = vmatprep.subr.mxu0 0.0
      %271 = vmatpush1.msra.mxu0 %v251
      %272 = vmatprep.subr.mxu0 0.0
      %273 = vmatpush1.msra.mxu0 0.0
      %274 = vmatprep.subr.mxu0 0.0
      %275 = vmatpush1.msra.mxu0 0.0
      %276 = vmatprep.subr.mxu0 0.0
      %277 = vmatpush1.msra.mxu0 0.0
      %278 = vmatprep.subr.mxu0 0.0
      %279 = vmatpush1.msra.mxu0 0.0
      %280 = vmatprep.subr.mxu0 0.0
      %281 = vmatpush1.msra.mxu0 0.0
      %282 = vmatprep.subr.mxu0 0.0
      %283 = vmatpush1.msra.mxu0 0.0
      %284 = vmatprep.subr.mxu0 0.0
      %285 = vmatpush1.msra.mxu0 0.0
      %286 = vmatprep.subr.mxu0 0.0
      %287 = vmatpush1.msra.mxu0 0.0
      %288 = vmatprep.subr.mxu0 0.0
      %289 = vmatpush1.msra.mxu0 0.0
      %290 = vmatprep.subr.mxu0 0.0
      %291 = vmatpush1.msra.mxu0 0.0
      %292 = vmatprep.subr.mxu0 0.0
      %293 = vmatpush1.msra.mxu0 0.0
      %294 = vmatprep.subr.mxu0 0.0
      %295 = vmatpush1.msra.mxu0 0.0
      %296 = vmatprep.subr.mxu0 0.0
      %297 = vmatpush1.msra.mxu0 0.0
      %298 = vmatprep.subr.mxu0 0.0
      %299 = vmatpush1.msra.mxu0 0.0
      %300 = vmatprep.subr.mxu0 0.0
      %301 = vmatpush1.msra.mxu0 0.0
      %302 = vmatprep.subr.mxu0 0.0
      %303 = vmatpush1.msra.mxu0 0.0
      %304 = vmatprep.subr.mxu0 0.0
      %305 = vmatpush1.msra.mxu0 0.0
      %306 = vmatprep.subr.mxu0 0.0
      %307 = vmatpush1.msra.mxu0 0.0
      %308 = vmatprep.subr.mxu0 0.0
      %309 = vmatpush1.msra.mxu0 0.0
      %310 = vmatprep.subr.mxu0 0.0
      %311 = vmatpush1.msra.mxu0 0.0
      %312 = vmatprep.subr.mxu0 0.0
      %313 = vmatpush1.msra.mxu0 0.0
      %314 = vmatprep.subr.mxu0 0.0
      %315 = vmatpush1.msra.mxu0 0.0
      %316 = vmatprep.subr.mxu0 0.0
      %317 = vmatpush1.msra.mxu0 0.0
      %318 = vmatprep.subr.mxu0 0.0
      %319 = vmatpush1.msra.mxu0 0.0
      %320 = vmatprep.mubr.f32.mxu0 0.0
      %321 = vmatmul.mubr.f32.gmra.mrb[0].mxu0 %v254
      %v322 = vpop.f32.mrb[0].mxu0
      %v323 = vadd.f32 0.0, %v322
      %v324 = vpop.f32.mrb[0].mxu0
      %325 = vdwg.mxu0
      %v326 = vround.ne.pseudo %v323
      %vm327 = vcmask 516096
      %328 = vst.msk [vmem:[%s193] sm:$0x1] %vm327, %v326
      %p329 = scmp.lt.s32.totalorder %s18, 1
      %s330 = scalar_select %p329, %s18, 1
      %p331 = scmp.lt.s32.totalorder %s19, 0
      %s332 = scalar_select %p331, %s19, 0
      %p333 = scmp.lt.s32.totalorder %s20, 0
      %s334 = scalar_select %p333, %s20, 0
      %s335 = sadd.s32 %s334, %s332
      %s336 = sadd.s32 %s335, %s330
      %s337 = scalar_lea.vmem %s2, %s336
      // Predicated region
      $region29: #{compress_jpeg.6} parent=27 // pred_check
        %p338 = pneg %p105
      $region30: #{compress_jpeg.6} parent=27 // pred_check_branch
        %340 = sbr.rel (%p338) target = $region32
      $region31: #{compress_jpeg.6} parent=27 // pred_region
        _
      $region32: #{compress_jpeg.6} parent=27 // pred_fallthru
        _
    $region28: #{compress_jpeg.6} parent=5 // pred_fallthru
      _
    %p341 = scmp.le.s32.totalorder 2, %s8
    // Predicated region
    $region33: #{compress_jpeg.6} parent=5 // pred_check
      %p342 = pneg %p341
    $region34: #{compress_jpeg.6} parent=5 // pred_check_branch
      %344 = sbr.rel (%p342) target = $region36
    $region35: #{compress_jpeg.6} parent=5 // pred_region
      %s345 = ssub.s32 %s8, 2
      // Predicated region
      $region37: #{compress_jpeg.6} parent=35 // pred_check
        %p346 = pneg %p111
      $region38: #{compress_jpeg.6} parent=35 // pred_check_branch
        %348 = sbr.rel (%p346) target = $region40
      $region39: #{compress_jpeg.6} parent=35 // pred_region
        %p349 = scmp.lt.s32.totalorder %s21, 1
        %s350 = scalar_select %p349, %s21, 1
        %p351 = scmp.lt.s32.totalorder %s22, 0
        %s352 = scalar_select %p351, %s22, 0
        %p353 = scmp.lt.s32.totalorder %s23, 0
        %s354 = scalar_select %p353, %s23, 0
        %s355 = sadd.s32 %s354, %s352
        %s356 = sadd.s32 %s355, %s350
        %s357 = scalar_lea.vmem %s2, %s356
      $region40: #{compress_jpeg.6} parent=35 // pred_fallthru
        _
    $region36: #{compress_jpeg.6} parent=5 // pred_fallthru
      _
  $region6: #{compress_jpeg.6} parent=0 // loop_footer
    %s12 = sadd.s32 1, %s8
  $region7: #{compress_jpeg.6} parent=0 // loop_footer_branch
    %7 = sbr.rel target = $region3
  $region8: #{compress_jpeg.6} parent=0 // loop_exit
    _

// kernel: compress_jpeg.5
$region0: #{compress_jpeg.5}
  #allocation0 [shape = 'u32[]', space=smem, size = 0x4, offset = 0x4, fixed_abs, tag = 'smem constant byte address 0x4 - core index']
  #allocation1 [shape = 'u32[144,128]{1,0:T(1,128)}', space=vmem, size = 0x12000, scoped, tag = 'internal scratch']
  %s0 = inlined_call_operand.vmem [shape: f32[2,2,8,16], index: 0, kind: input, shape index: {}]
  %s1 = inlined_call_operand.vmem [shape: f32[128,128], index: 1, kind: input, shape index: {}]
  %s2 = inlined_call_operand.vmem [shape: f32[2,2,128], index: 2, kind: output, shape index: {}]
  %s3 = sld [smem:[#allocation0]]
  $region41: #{compress_jpeg.5} parent=0
    _
  %s5 = ssub.s32 1, %s3
  %s6 = scalar_select 0, %s5, %s3
  loop: start=0, step=1, limit=4
  $region2: #{compress_jpeg.5} parent=0 // loop_pre_header
    _
  $region3: #{compress_jpeg.5} parent=0 // loop_header
    %s8 = sphi 0, %s12
    %p9 = scmp.ge.s32.totalorder %s8, 4
    %s15 = sphi 0, %s34
    %s16 = sphi 0, %s30
    %s17 = sphi 0, %s26
    %s18 = sphi 0, %s15
    %s19 = sphi 0, %s16
    %s20 = sphi 0, %s17
    %s21 = sphi 0, %s18
    %s22 = sphi 0, %s19
    %s23 = sphi 0, %s20
    %s41 = sphi 0, %s43
    %s44 = sphi 0, %s41
    %s45 = sphi 0, %s44
    %s61 = sphi 0, %s45
    %s65 = sphi 0, %s65
    %s67 = sphi 0, %s65
    %s68 = sphi 0, %s67
    %s82 = sphi 0, %s68
    %s92 = sphi 0, %s94
    %s95 = sphi 0, %s92
    %s96 = sphi 0, %s95
    %s112 = sphi 0, %s96
  $region4: #{compress_jpeg.5} parent=0 // loop_header_branch
    %11 = sbr.rel (%p9) target = $region8
  $region5: #{compress_jpeg.5} parent=0 // loop_body
    %s13 = ssub.s32 %s8, 1
    %s14 = ssub.s32 %s8, 2
    %s24 = sadd.s32 1, %s17
    %p25 = scmp.ge.s32.totalorder %s24, 1
    %s26 = scalar_select %p25, 0, %s24
    %s27 = sadd.s32 1, %s16
    %s28 = scalar_select %p25, %s27, %s16
    %p29 = scmp.ge.s32.totalorder %s28, 1
    %s30 = scalar_select %p29, 0, %s28
    %s31 = sadd.s32 1, %s15
    %s32 = scalar_select %p29, %s31, %s15
    %p33 = scmp.ge.s32.totalorder %s32, 2
    %s34 = scalar_select %p33, 0, %s32
    %s35 = ssub.s32 %s15, %s34
    %s36 = ssub.s32 %s16, %s30
    %s37 = sor.u32 %s35, %s36
    %s38 = ssub.s32 %s17, %s26
    %s39 = sor.u32 %s37, %s38
    %p40 = scmp.eq.s32.totalorder %s39, 0
    %s42 = sadd.s32 %s41, 1
    %s43 = scalar_select %p40, %s41, %s42
    %p46 = pneg %p40
    %p47 = scmp.eq.s32.totalorder %s8, 1
    %p48 = por %p46, %p47
    %p49 = scmp.ne.s32.totalorder %s41, %s44
    %p50 = scmp.eq.s32.totalorder %s8, 0
    %p51 = por %p49, %p50
    %p52 = scmp.ne.s32.totalorder %s41, %s44
    %p53 = scmp.eq.s32.totalorder %s13, 1
    %p54 = por %p52, %p53
    %p55 = scmp.ne.s32.totalorder %s44, %s45
    %p56 = scmp.eq.s32.totalorder %s13, 0
    %p57 = por %p55, %p56
    %p58 = scmp.ne.s32.totalorder %s44, %s45
    %p59 = scmp.eq.s32.totalorder %s14, 1
    %p60 = por %p58, %p59
    %p62 = scmp.ne.s32.totalorder %s45, %s61
    %p63 = scmp.eq.s32.totalorder %s14, 0
    %p64 = por %p62, %p63
    %s66 = sadd.s32 %s65, 1
    %p69 = scmp.eq.s32.totalorder %s8, 1
    %p70 = scmp.ne.s32.totalorder %s65, %s67
    %p71 = scmp.eq.s32.totalorder %s8, 0
    %p72 = por %p70, %p71
    %p73 = scmp.ne.s32.totalorder %s65, %s67
    %p74 = scmp.eq.s32.totalorder %s13, 1
    %p75 = por %p73, %p74
    %p76 = scmp.ne.s32.totalorder %s67, %s68
    %p77 = scmp.eq.s32.totalorder %s13, 0
    %p78 = por %p76, %p77
    %p79 = scmp.ne.s32.totalorder %s67, %s68
    %p80 = scmp.eq.s32.totalorder %s14, 1
    %p81 = por %p79, %p80
    %p83 = scmp.ne.s32.totalorder %s68, %s82
    %p84 = scmp.eq.s32.totalorder %s14, 0
    %p85 = por %p83, %p84
    %s86 = ssub.s32 %s15, %s34
    %s87 = ssub.s32 %s16, %s30
    %s88 = sor.u32 %s86, %s87
    %s89 = ssub.s32 %s17, %s26
    %s90 = sor.u32 %s88, %s89
    %p91 = scmp.eq.s32.totalorder %s90, 0
    %s93 = sadd.s32 %s92, 1
    %s94 = scalar_select %p91, %s92, %s93
    %p97 = pneg %p91
    %p98 = scmp.eq.s32.totalorder %s8, 1
    %p99 = por %p97, %p98
    %p100 = scmp.ne.s32.totalorder %s92, %s95
    %p101 = scmp.eq.s32.totalorder %s8, 0
    %p102 = por %p100, %p101
    %p103 = scmp.ne.s32.totalorder %s92, %s95
    %p104 = scmp.eq.s32.totalorder %s13, 1
    %p105 = por %p103, %p104
    %p106 = scmp.ne.s32.totalorder %s95, %s96
    %p107 = scmp.eq.s32.totalorder %s13, 0
    %p108 = por %p106, %p107
    %p109 = scmp.ne.s32.totalorder %s95, %s96
    %p110 = scmp.eq.s32.totalorder %s14, 1
    %p111 = por %p109, %p110
    %p113 = scmp.ne.s32.totalorder %s96, %s112
    %p114 = scmp.eq.s32.totalorder %s14, 0
    %p115 = por %p113, %p114
    %p116 = scmp.le.s32.totalorder 1, %s8
    %p117 = scmp.lt.s32.totalorder %s8, 3
    %p118 = pnand %p116, %p117
    %p119 = pneg %p118
    // Predicated region
    $region9: #{compress_jpeg.5} parent=5 // pred_check
      _
    $region10: #{compress_jpeg.5} parent=5 // pred_check_branch
      %121 = sbr.rel (%p118) target = $region12
    $region11: #{compress_jpeg.5} parent=5 // pred_region
      %s122 = ssub.s32 %s8, 1
      // Predicated region
      $region13: #{compress_jpeg.5} parent=11 // pred_check
        %p123 = pneg %p78
      $region14: #{compress_jpeg.5} parent=11 // pred_check_branch
        %125 = sbr.rel (%p123) target = $region16
      $region15: #{compress_jpeg.5} parent=11 // pred_region
        _
      $region16: #{compress_jpeg.5} parent=11 // pred_fallthru
        _
    $region12: #{compress_jpeg.5} parent=5 // pred_fallthru
      _
    %p126 = scmp.lt.s32.totalorder %s8, 2
    // Predicated region
    $region17: #{compress_jpeg.5} parent=5 // pred_check
      %p127 = pneg %p126
    $region18: #{compress_jpeg.5} parent=5 // pred_check_branch
      %129 = sbr.rel (%p127) target = $region20
    $region19: #{compress_jpeg.5} parent=5 // pred_region
      // Predicated region
      $region21: #{compress_jpeg.5} parent=19 // pred_check
        %p130 = pneg %p51
      $region22: #{compress_jpeg.5} parent=19 // pred_check_branch
        %132 = sbr.rel (%p130) target = $region24
      $region23: #{compress_jpeg.5} parent=19 // pred_region
        %s133 = smul.u32 2, %s16
        %p134 = scmp.lt.s32.totalorder %s15, 1
        %s135 = scalar_select %p134, %s15, 1
        %p136 = scmp.lt.s32.totalorder %s133, 1
        %s137 = scalar_select %p136, %s133, 1
        %p138 = scmp.lt.s32.totalorder %s17, 0
        %s139 = scalar_select %p138, %s17, 0
        %s140 = sadd.s32 %s139, %s137
        %s141 = smul.addr %s135, 2
        %s142 = sadd.s32 %s140, %s141
        %s143 = smul.addr %s142, 8
        %s144 = scalar_lea.vmem %s0, %s143
        %s145 = smul.u32 2, %s16
      $region24: #{compress_jpeg.5} parent=19 // pred_fallthru
        _
    $region20: #{compress_jpeg.5} parent=5 // pred_fallthru
      _
    %p146 = scmp.le.s32.totalorder 1, %s8
    %p147 = scmp.lt.s32.totalorder %s8, 3
    %p148 = pnand %p146, %p147
    %p149 = pneg %p148
    // Predicated region
    $region25: #{compress_jpeg.5} parent=5 // pred_check
      _
    $region26: #{compress_jpeg.5} parent=5 // pred_check_branch
      %151 = sbr.rel (%p148) target = $region28
    $region27: #{compress_jpeg.5} parent=5 // pred_region
      %s152 = ssub.s32 %s8, 1
      %s153 = smul.u32 2, %s19
      %p154 = scmp.lt.s32.totalorder %s18, 1
      %s155 = scalar_select %p154, %s18, 1
      %p156 = scmp.lt.s32.totalorder %s153, 1
      %s157 = scalar_select %p156, %s153, 1
      %p158 = scmp.lt.s32.totalorder %s20, 0
      %s159 = scalar_select %p158, %s20, 0
      %s160 = sadd.s32 %s159, %s157
      %s161 = smul.addr %s155, 2
      %s162 = sadd.s32 %s160, %s161
      %s163 = smul.addr %s162, 8
      %s164 = scalar_lea.vmem %s0, %s163
      %p165 = pneg %p57
      %p166 = pneg %p54
      %p167 = pneg %p78
      %p168 = pneg %p75
      %p169 = pneg %p108
      %p170 = pneg %p105
      %p171 = scmp.lt.s32.totalorder %s18, 1
      %s172 = scalar_select %p171, %s18, 1
      %p173 = scmp.lt.s32.totalorder %s19, 0
      %s174 = scalar_select %p173, %s19, 0
      %p175 = scmp.lt.s32.totalorder %s20, 0
      %s176 = scalar_select %p175, %s20, 0
      %s177 = sadd.s32 %s176, %s174
      %s178 = sadd.s32 %s177, %s172
      %s179 = smul.addr %s178, 2
      %s180 = scalar_lea.vmem %s2, %s179
      %s181 = smul.u32 2, %s19
      %p182 = scmp.lt.s32.totalorder %s18, 1
      %s183 = scalar_select %p182, %s18, 1
      %p184 = scmp.lt.s32.totalorder %s181, 1
      %s185 = scalar_select %p184, %s181, 1
      %p186 = scmp.lt.s32.totalorder %s20, 0
      %s187 = scalar_select %p186, %s20, 0
      %s188 = sadd.s32 %s187, %s185
      %s189 = smul.addr %s183, 2
      %s190 = sadd.s32 %s188, %s189
      %s191 = smul.addr %s190, 8
      %s192 = scalar_lea.vmem %s0, %s191
      %s193 = smul.u32 2, %s19
      %p194 = scmp.lt.s32.totalorder %s18, 1
      %s195 = scalar_select %p194, %s18, 1
      %p196 = scmp.lt.s32.totalorder %s19, 0
      %s197 = scalar_select %p196, %s19, 0
      %p198 = scmp.lt.s32.totalorder %s20, 0
      %s199 = scalar_select %p198, %s20, 0
      %s200 = sadd.s32 %s199, %s197
      %s201 = sadd.s32 %s200, %s195
      %s202 = smul.addr %s201, 2
      %s203 = scalar_lea.vmem %s2, %s202
      %v204 = vld [vmem:[%s192] sm:$0x1]
      %v205 = vld [vmem:[%s192 + $0x8] sm:$0x1]
      %v206 = vld [vmem:[%s192 + $0x1] sm:$0x1]
      %v207 = vld [vmem:[%s192 + $0x9] sm:$0x1]
      %v208 = vld [vmem:[%s192 + $0x2] sm:$0x1]
      %v209 = vld [vmem:[%s192 + $0xa] sm:$0x1]
      %v210 = vld [vmem:[%s192 + $0x3] sm:$0x1]
      %v211 = vld [vmem:[%s192 + $0xb] sm:$0x1]
      %v212 = vld [vmem:[%s192 + $0x4] sm:$0x1]
      %v213 = vld [vmem:[%s192 + $0xc] sm:$0x1]
      %v214 = vld [vmem:[%s192 + $0x5] sm:$0x1]
      %v215 = vld [vmem:[%s192 + $0xd] sm:$0x1]
      %v216 = vld [vmem:[%s192 + $0x6] sm:$0x1]
      %v217 = vld [vmem:[%s192 + $0xe] sm:$0x1]
      %v218 = vld [vmem:[%s192 + $0x7] sm:$0x1]
      %v219 = vld [vmem:[%s192 + $0xf] sm:$0x1]
      %v222 = vrot.slane %v205, 7
      %vm223 = vcmask 1041409
      %v224 = vsel %vm223, %v222, %v204
      %v228 = vrot.slane %v207, 7
      %v229 = vsel %vm223, %v228, %v206
      %230 = vrot.lane.b32.xlu0 %v229, 16
      %v231 = vpop.permute.xlu0 %230
      %v235 = vrot.slane %v209, 7
      %v236 = vsel %vm223, %v235, %v208
      %237 = vrot.lane.b32.xlu0 %v236, 32
      %v238 = vpop.permute.xlu0 %237
      %v242 = vrot.slane %v211, 7
      %v243 = vsel %vm223, %v242, %v210
      %244 = vrot.lane.b32.xlu0 %v243, 48
      %v245 = vpop.permute.xlu0 %244
      %v249 = vrot.slane %v213, 7
      %v250 = vsel %vm223, %v249, %v212
      %251 = vrot.lane.b32.xlu0 %v250, 64
      %v252 = vpop.permute.xlu0 %251
      %v256 = vrot.slane %v215, 7
      %v257 = vsel %vm223, %v256, %v214
      %258 = vrot.lane.b32.xlu0 %v257, 80
      %v259 = vpop.permute.xlu0 %258
      %v263 = vrot.slane %v217, 7
      %v264 = vsel %vm223, %v263, %v216
      %265 = vrot.lane.b32.xlu0 %v264, 96
      %v266 = vpop.permute.xlu0 %265
      %v270 = vrot.slane %v219, 7
      %v271 = vsel %vm223, %v270, %v218
      %272 = vrot.lane.b32.xlu0 %v271, 112
      %v273 = vpop.permute.xlu0 %272
      %vm275 = vcmask 130048
      %v276 = vsel %vm275, %v224, %v231
      %vm277 = vcmask 261120
      %v278 = vsel %vm277, %v276, %v238
      %vm279 = vcmask 392192
      %v280 = vsel %vm279, %v278, %v245
      %vm281 = vcmask 523264
      %v282 = vsel %vm281, %v280, %v252
      %vm283 = vcmask 654336
      %v284 = vsel %vm283, %v282, %v259
      %vm285 = vcmask 785408
      %v286 = vsel %vm285, %v284, %v266
      %vm287 = vcmask 916480
      %v288 = vsel %vm287, %v286, %v273
      %v289 = vld [vmem:[%s1] sm:$0xff]
      %v290 = vld [vmem:[%s1 + $0x8] sm:$0xff]
      %v291 = vld [vmem:[%s1 + $0x10] sm:$0xff]
      %v292 = vld [vmem:[%s1 + $0x18] sm:$0xff]
      %v293 = vld [vmem:[%s1 + $0x20] sm:$0xff]
      %v294 = vld [vmem:[%s1 + $0x28] sm:$0xff]
      %v295 = vld [vmem:[%s1 + $0x30] sm:$0xff]
      %v296 = vld [vmem:[%s1 + $0x38] sm:$0xff]
      %v297 = vld [vmem:[%s1 + $0x40] sm:$0xff]
      %v298 = vld [vmem:[%s1 + $0x48] sm:$0xff]
      %v299 = vld [vmem:[%s1 + $0x50] sm:$0xff]
      %v300 = vld [vmem:[%s1 + $0x58] sm:$0xff]
      %v301 = vld [vmem:[%s1 + $0x60] sm:$0xff]
      %v302 = vld [vmem:[%s1 + $0x68] sm:$0xff]
      %v303 = vld [vmem:[%s1 + $0x70] sm:$0xff]
      %v304 = vld [vmem:[%s1 + $0x78] sm:$0xff]
      %305 = vmatprep.subr.mxu0 0.0
      %306 = vmatpush1.msra.mxu0 %v289
      %307 = vmatprep.subr.mxu0 0.0
      %308 = vmatpush1.msra.mxu0 %v290
      %309 = vmatprep.subr.mxu0 0.0
      %310 = vmatpush1.msra.mxu0 %v291
      %311 = vmatprep.subr.mxu0 0.0
      %312 = vmatpush1.msra.mxu0 %v292
      %313 = vmatprep.subr.mxu0 0.0
      %314 = vmatpush1.msra.mxu0 %v293
      %315 = vmatprep.subr.mxu0 0.0
      %316 = vmatpush1.msra.mxu0 %v294
      %317 = vmatprep.subr.mxu0 0.0
      %318 = vmatpush1.msra.mxu0 %v295
      %319 = vmatprep.subr.mxu0 0.0
      %320 = vmatpush1.msra.mxu0 %v296
      %321 = vmatprep.subr.mxu0 0.0
      %322 = vmatpush1.msra.mxu0 %v297
      %323 = vmatprep.subr.mxu0 0.0
      %324 = vmatpush1.msra.mxu0 %v298
      %325 = vmatprep.subr.mxu0 0.0
      %326 = vmatpush1.msra.mxu0 %v299
      %327 = vmatprep.subr.mxu0 0.0
      %328 = vmatpush1.msra.mxu0 %v300
      %329 = vmatprep.subr.mxu0 0.0
      %330 = vmatpush1.msra.mxu0 %v301
      %331 = vmatprep.subr.mxu0 0.0
      %332 = vmatpush1.msra.mxu0 %v302
      %333 = vmatprep.subr.mxu0 0.0
      %334 = vmatpush1.msra.mxu0 %v303
      %335 = vmatprep.subr.mxu0 0.0
      %336 = vmatpush1.msra.mxu0 %v304
      %337 = vmatprep.subr.mxu0 0.0
      %338 = vmatpush1.msra.mxu0 0.0
      %339 = vmatprep.subr.mxu0 0.0
      %340 = vmatpush1.msra.mxu0 0.0
      %341 = vmatprep.subr.mxu0 0.0
      %342 = vmatpush1.msra.mxu0 0.0
      %343 = vmatprep.subr.mxu0 0.0
      %344 = vmatpush1.msra.mxu0 0.0
      %345 = vmatprep.subr.mxu0 0.0
      %346 = vmatpush1.msra.mxu0 0.0
      %347 = vmatprep.subr.mxu0 0.0
      %348 = vmatpush1.msra.mxu0 0.0
      %349 = vmatprep.subr.mxu0 0.0
      %350 = vmatpush1.msra.mxu0 0.0
      %351 = vmatprep.subr.mxu0 0.0
      %352 = vmatpush1.msra.mxu0 0.0
      %353 = vmatprep.subr.mxu0 0.0
      %354 = vmatpush1.msra.mxu0 0.0
      %355 = vmatprep.subr.mxu0 0.0
      %356 = vmatpush1.msra.mxu0 0.0
      %357 = vmatprep.subr.mxu0 0.0
      %358 = vmatpush1.msra.mxu0 0.0
      %359 = vmatprep.subr.mxu0 0.0
      %360 = vmatpush1.msra.mxu0 0.0
      %361 = vmatprep.subr.mxu0 0.0
      %362 = vmatpush1.msra.mxu0 0.0
      %363 = vmatprep.subr.mxu0 0.0
      %364 = vmatpush1.msra.mxu0 0.0
      %365 = vmatprep.subr.mxu0 0.0
      %366 = vmatpush1.msra.mxu0 0.0
      %367 = vmatprep.subr.mxu0 0.0
      %368 = vmatpush1.msra.mxu0 0.0
      %369 = vmatprep.mubr.f32.mxu0 0.0
      %370 = vmatmul.mubr.f32.gmra.mrb[0].mxu0 %v288
      %v371 = vpop.f32.mrb[0].mxu0
      %v372 = vadd.f32 0.0, %v371
      %v373 = vpop.f32.mrb[0].mxu0
      %374 = vdwg.mxu0
      %v375 = vround.ne.pseudo %v372
      %376 = vst [vmem:[%s203] sm:$0x3] %v375
      %p377 = scmp.lt.s32.totalorder %s18, 1
      %s378 = scalar_select %p377, %s18, 1
      %p379 = scmp.lt.s32.totalorder %s19, 0
      %s380 = scalar_select %p379, %s19, 0
      %p381 = scmp.lt.s32.totalorder %s20, 0
      %s382 = scalar_select %p381, %s20, 0
      %s383 = sadd.s32 %s382, %s380
      %s384 = sadd.s32 %s383, %s378
      %s385 = smul.addr %s384, 2
      %s386 = scalar_lea.vmem %s2, %s385
      // Predicated region
      $region29: #{compress_jpeg.5} parent=27 // pred_check
        %p387 = pneg %p105
      $region30: #{compress_jpeg.5} parent=27 // pred_check_branch
        %389 = sbr.rel (%p387) target = $region32
      $region31: #{compress_jpeg.5} parent=27 // pred_region
        _
      $region32: #{compress_jpeg.5} parent=27 // pred_fallthru
        _
    $region28: #{compress_jpeg.5} parent=5 // pred_fallthru
      _
    %p390 = scmp.le.s32.totalorder 2, %s8
    // Predicated region
    $region33: #{compress_jpeg.5} parent=5 // pred_check
      %p391 = pneg %p390
    $region34: #{compress_jpeg.5} parent=5 // pred_check_branch
      %393 = sbr.rel (%p391) target = $region36
    $region35: #{compress_jpeg.5} parent=5 // pred_region
      %s394 = ssub.s32 %s8, 2
      // Predicated region
      $region37: #{compress_jpeg.5} parent=35 // pred_check
        %p395 = pneg %p111
      $region38: #{compress_jpeg.5} parent=35 // pred_check_branch
        %397 = sbr.rel (%p395) target = $region40
      $region39: #{compress_jpeg.5} parent=35 // pred_region
        %p398 = scmp.lt.s32.totalorder %s21, 1
        %s399 = scalar_select %p398, %s21, 1
        %p400 = scmp.lt.s32.totalorder %s22, 0
        %s401 = scalar_select %p400, %s22, 0
        %p402 = scmp.lt.s32.totalorder %s23, 0
        %s403 = scalar_select %p402, %s23, 0
        %s404 = sadd.s32 %s403, %s401
        %s405 = sadd.s32 %s404, %s399
        %s406 = smul.addr %s405, 2
        %s407 = scalar_lea.vmem %s2, %s406
      $region40: #{compress_jpeg.5} parent=35 // pred_fallthru
        _
    $region36: #{compress_jpeg.5} parent=5 // pred_fallthru
      _
  $region6: #{compress_jpeg.5} parent=0 // loop_footer
    %s12 = sadd.s32 1, %s8
  $region7: #{compress_jpeg.5} parent=0 // loop_footer_branch
    %7 = sbr.rel target = $region3
  $region8: #{compress_jpeg.5} parent=0 // loop_exit
    _

// kernel: compress_jpeg.4
$region0: #{compress_jpeg.4}
  #allocation0 [shape = 'u32[]', space=smem, size = 0x4, offset = 0x4, fixed_abs, tag = 'smem constant byte address 0x4 - core index']
  #allocation1 [shape = 'u32[144,128]{1,0:T(1,128)}', space=vmem, size = 0x12000, scoped, tag = 'internal scratch']
  %s0 = inlined_call_operand.hbm [shape: f32[2,3,16,16], index: 0, kind: input, shape index: {}]
  %s1 = inlined_call_operand.hbm [shape: f32[8,16], index: 1, kind: input, shape index: {}]
  %s2 = inlined_call_operand.vmem [shape: f32[16,8], index: 2, kind: input, shape index: {}]
  %s3 = inlined_call_operand.vmem [shape: f32[2,16,16], index: 3, kind: output, shape index: {0}]
  %s4 = inlined_call_operand.vmem [shape: f32[2,8,8], index: 4, kind: output, shape index: {1}]
  %s5 = inlined_call_operand.vmem [shape: f32[2,8,8], index: 5, kind: output, shape index: {2}]
  %6 = xla_tuple %s3, %s4, %s5
  %s7 = sld [smem:[#allocation0]]
  $region69: #{compress_jpeg.4} parent=0
    _
  %s9 = ssub.s32 1, %s7
  %s10 = scalar_select 0, %s9, %s7
  $region1: #{compress_jpeg.4} parent=0
    #allocation2 [shape = 'u8[49152]{0}', space=vmem, size = 0xc000, scoped, tag = 'input window, operand 0']
    #allocation3 [shape = 's32[2]{0}', space=sflag, size = 0x8, scoped, tag = 'scoped memory for compress_jpeg.4']
    #allocation4 [shape = 'u8[4096]{0}', space=vmem, size = 0x1000, scoped, tag = 'input window, operand 1, single buffered']
    #allocation5 [shape = 's32[1]{0}', space=sflag, size = 0x4, scoped, tag = 'scoped memory for compress_jpeg.4']
    %11 = vsyncpa [#allocation3], 0
    %s12 = scalar_lea.sflag [#allocation3], 1
    %13 = vsyncpa %s12, 0
    %14 = vsyncpa [#allocation5], 0
    loop: start=0, step=1, limit=4
    $region2: #{compress_jpeg.4} parent=1 // loop_pre_header
      _
    $region3: #{compress_jpeg.4} parent=1 // loop_header
      %s16 = sphi 0, %s20
      %p17 = scmp.ge.s32.totalorder %s16, 4
      %s23 = sphi 0, %s42
      %s24 = sphi 0, %s38
      %s25 = sphi 0, %s34
      %s26 = sphi 0, %s23
      %s27 = sphi 0, %s24
      %s28 = sphi 0, %s25
      %s29 = sphi 0, %s26
      %s30 = sphi 0, %s27
      %s31 = sphi 0, %s28
      %s49 = sphi 0, %s51
      %s52 = sphi 0, %s49
      %s53 = sphi 0, %s52
      %s69 = sphi 0, %s53
      %s73 = sphi 0, %s73
      %s75 = sphi 0, %s73
      %s76 = sphi 0, %s75
      %s90 = sphi 0, %s76
      %s94 = sphi 0, %s94
      %s96 = sphi 0, %s94
      %s97 = sphi 0, %s96
      %s111 = sphi 0, %s97
      %s121 = sphi 0, %s123
      %s124 = sphi 0, %s121
      %s125 = sphi 0, %s124
      %s141 = sphi 0, %s125
      %s151 = sphi 0, %s153
      %s154 = sphi 0, %s151
      %s155 = sphi 0, %s154
      %s171 = sphi 0, %s155
      %s181 = sphi 0, %s183
      %s184 = sphi 0, %s181
      %s185 = sphi 0, %s184
      %s201 = sphi 0, %s185
    $region4: #{compress_jpeg.4} parent=1 // loop_header_branch
      %19 = sbr.rel (%p17) target = $region8
    $region5: #{compress_jpeg.4} parent=1 // loop_body
      %s21 = ssub.s32 %s16, 1
      %s22 = ssub.s32 %s16, 2
      %s32 = sadd.s32 1, %s25
      %p33 = scmp.ge.s32.totalorder %s32, 1
      %s34 = scalar_select %p33, 0, %s32
      %s35 = sadd.s32 1, %s24
      %s36 = scalar_select %p33, %s35, %s24
      %p37 = scmp.ge.s32.totalorder %s36, 1
      %s38 = scalar_select %p37, 0, %s36
      %s39 = sadd.s32 1, %s23
      %s40 = scalar_select %p37, %s39, %s23
      %p41 = scmp.ge.s32.totalorder %s40, 2
      %s42 = scalar_select %p41, 0, %s40
      %s43 = ssub.s32 %s23, %s42
      %s44 = ssub.s32 %s24, %s38
      %s45 = sor.u32 %s43, %s44
      %s46 = ssub.s32 %s25, %s34
      %s47 = sor.u32 %s45, %s46
      %p48 = scmp.eq.s32.totalorder %s47, 0
      %s50 = sadd.s32 %s49, 1
      %s51 = scalar_select %p48, %s49, %s50
      %p54 = pneg %p48
      %p55 = scmp.eq.s32.totalorder %s16, 1
      %p56 = por %p54, %p55
      %p57 = scmp.ne.s32.totalorder %s49, %s52
      %p58 = scmp.eq.s32.totalorder %s16, 0
      %p59 = por %p57, %p58
      %p60 = scmp.ne.s32.totalorder %s49, %s52
      %p61 = scmp.eq.s32.totalorder %s21, 1
      %p62 = por %p60, %p61
      %p63 = scmp.ne.s32.totalorder %s52, %s53
      %p64 = scmp.eq.s32.totalorder %s21, 0
      %p65 = por %p63, %p64
      %p66 = scmp.ne.s32.totalorder %s52, %s53
      %p67 = scmp.eq.s32.totalorder %s22, 1
      %p68 = por %p66, %p67
      %p70 = scmp.ne.s32.totalorder %s53, %s69
      %p71 = scmp.eq.s32.totalorder %s22, 0
      %p72 = por %p70, %p71
      %s74 = sadd.s32 %s73, 1
      %p77 = scmp.eq.s32.totalorder %s16, 1
      %p78 = scmp.ne.s32.totalorder %s73, %s75
      %p79 = scmp.eq.s32.totalorder %s16, 0
      %p80 = por %p78, %p79
      %p81 = scmp.ne.s32.totalorder %s73, %s75
      %p82 = scmp.eq.s32.totalorder %s21, 1
      %p83 = por %p81, %p82
      %p84 = scmp.ne.s32.totalorder %s75, %s76
      %p85 = scmp.eq.s32.totalorder %s21, 0
      %p86 = por %p84, %p85
      %p87 = scmp.ne.s32.totalorder %s75, %s76
      %p88 = scmp.eq.s32.totalorder %s22, 1
      %p89 = por %p87, %p88
      %p91 = scmp.ne.s32.totalorder %s76, %s90
      %p92 = scmp.eq.s32.totalorder %s22, 0
      %p93 = por %p91, %p92
      %s95 = sadd.s32 %s94, 1
      %p98 = scmp.eq.s32.totalorder %s16, 1
      %p99 = scmp.ne.s32.totalorder %s94, %s96
      %p100 = scmp.eq.s32.totalorder %s16, 0
      %p101 = por %p99, %p100
      %p102 = scmp.ne.s32.totalorder %s94, %s96
      %p103 = scmp.eq.s32.totalorder %s21, 1
      %p104 = por %p102, %p103
      %p105 = scmp.ne.s32.totalorder %s96, %s97
      %p106 = scmp.eq.s32.totalorder %s21, 0
      %p107 = por %p105, %p106
      %p108 = scmp.ne.s32.totalorder %s96, %s97
      %p109 = scmp.eq.s32.totalorder %s22, 1
      %p110 = por %p108, %p109
      %p112 = scmp.ne.s32.totalorder %s97, %s111
      %p113 = scmp.eq.s32.totalorder %s22, 0
      %p114 = por %p112, %p113
      %s115 = ssub.s32 %s23, %s42
      %s116 = ssub.s32 %s24, %s38
      %s117 = sor.u32 %s115, %s116
      %s118 = ssub.s32 %s25, %s34
      %s119 = sor.u32 %s117, %s118
      %p120 = scmp.eq.s32.totalorder %s119, 0
      %s122 = sadd.s32 %s121, 1
      %s123 = scalar_select %p120, %s121, %s122
      %p126 = pneg %p120
      %p127 = scmp.eq.s32.totalorder %s16, 1
      %p128 = por %p126, %p127
      %p129 = scmp.ne.s32.totalorder %s121, %s124
      %p130 = scmp.eq.s32.totalorder %s16, 0
      %p131 = por %p129, %p130
      %p132 = scmp.ne.s32.totalorder %s121, %s124
      %p133 = scmp.eq.s32.totalorder %s21, 1
      %p134 = por %p132, %p133
      %p135 = scmp.ne.s32.totalorder %s124, %s125
      %p136 = scmp.eq.s32.totalorder %s21, 0
      %p137 = por %p135, %p136
      %p138 = scmp.ne.s32.totalorder %s124, %s125
      %p139 = scmp.eq.s32.totalorder %s22, 1
      %p140 = por %p138, %p139
      %p142 = scmp.ne.s32.totalorder %s125, %s141
      %p143 = scmp.eq.s32.totalorder %s22, 0
      %p144 = por %p142, %p143
      %s145 = ssub.s32 %s23, %s42
      %s146 = ssub.s32 %s24, %s38
      %s147 = sor.u32 %s145, %s146
      %s148 = ssub.s32 %s25, %s34
      %s149 = sor.u32 %s147, %s148
      %p150 = scmp.eq.s32.totalorder %s149, 0
      %s152 = sadd.s32 %s151, 1
      %s153 = scalar_select %p150, %s151, %s152
      %p156 = pneg %p150
      %p157 = scmp.eq.s32.totalorder %s16, 1
      %p158 = por %p156, %p157
      %p159 = scmp.ne.s32.totalorder %s151, %s154
      %p160 = scmp.eq.s32.totalorder %s16, 0
      %p161 = por %p159, %p160
      %p162 = scmp.ne.s32.totalorder %s151, %s154
      %p163 = scmp.eq.s32.totalorder %s21, 1
      %p164 = por %p162, %p163
      %p165 = scmp.ne.s32.totalorder %s154, %s155
      %p166 = scmp.eq.s32.totalorder %s21, 0
      %p167 = por %p165, %p166
      %p168 = scmp.ne.s32.totalorder %s154, %s155
      %p169 = scmp.eq.s32.totalorder %s22, 1
      %p170 = por %p168, %p169
      %p172 = scmp.ne.s32.totalorder %s155, %s171
      %p173 = scmp.eq.s32.totalorder %s22, 0
      %p174 = por %p172, %p173
      %s175 = ssub.s32 %s23, %s42
      %s176 = ssub.s32 %s24, %s38
      %s177 = sor.u32 %s175, %s176
      %s178 = ssub.s32 %s25, %s34
      %s179 = sor.u32 %s177, %s178
      %p180 = scmp.eq.s32.totalorder %s179, 0
      %s182 = sadd.s32 %s181, 1
      %s183 = scalar_select %p180, %s181, %s182
      %p186 = pneg %p180
      %p187 = scmp.eq.s32.totalorder %s16, 1
      %p188 = por %p186, %p187
      %p189 = scmp.ne.s32.totalorder %s181, %s184
      %p190 = scmp.eq.s32.totalorder %s16, 0
      %p191 = por %p189, %p190
      %p192 = scmp.ne.s32.totalorder %s181, %s184
      %p193 = scmp.eq.s32.totalorder %s21, 1
      %p194 = por %p192, %p193
      %p195 = scmp.ne.s32.totalorder %s184, %s185
      %p196 = scmp.eq.s32.totalorder %s21, 0
      %p197 = por %p195, %p196
      %p198 = scmp.ne.s32.totalorder %s184, %s185
      %p199 = scmp.eq.s32.totalorder %s22, 1
      %p200 = por %p198, %p199
      %p202 = scmp.ne.s32.totalorder %s185, %s201
      %p203 = scmp.eq.s32.totalorder %s22, 0
      %p204 = por %p202, %p203
      %p205 = scmp.le.s32.totalorder 1, %s16
      %p206 = scmp.lt.s32.totalorder %s16, 3
      %p207 = pnand %p205, %p206
      %p208 = pneg %p207
      // Predicated region
      $region9: #{compress_jpeg.4} parent=5 // pred_check
        _
      $region10: #{compress_jpeg.4} parent=5 // pred_check_branch
        %210 = sbr.rel (%p207) target = $region12
      $region11: #{compress_jpeg.4} parent=5 // pred_region
        %s211 = ssub.s32 %s16, 1
        // Predicated region
        $region13: #{compress_jpeg.4} parent=11 // pred_check
          %p212 = pneg %p86
        $region14: #{compress_jpeg.4} parent=11 // pred_check_branch
          %214 = sbr.rel (%p212) target = $region16
        $region15: #{compress_jpeg.4} parent=11 // pred_region
          %s216 = ssub.s32 128, 128
          %217 = vsyncadd [#allocation5], %s216
          %s219 = sshll.u32 [#allocation4], 4
          %s220 = int_to_ptr.vmem [resolvable:$true] %s219
          %222 = dma.hbm_to_vmem [thread:$0]  %s1, 128, %s220, [#allocation5]
        $region16: #{compress_jpeg.4} parent=11 // pred_fallthru
          _
        // Predicated region
        $region17: #{compress_jpeg.4} parent=11 // pred_check
          %p223 = pneg %p107
        $region18: #{compress_jpeg.4} parent=11 // pred_check_branch
          %225 = sbr.rel (%p223) target = $region20
        $region19: #{compress_jpeg.4} parent=11 // pred_region
          _
        $region20: #{compress_jpeg.4} parent=11 // pred_fallthru
          _
      $region12: #{compress_jpeg.4} parent=5 // pred_fallthru
        _
      %p226 = scmp.lt.s32.totalorder %s16, 2
      // Predicated region
      $region21: #{compress_jpeg.4} parent=5 // pred_check
        %p227 = pneg %p226
      $region22: #{compress_jpeg.4} parent=5 // pred_check_branch
        %229 = sbr.rel (%p227) target = $region24
      $region23: #{compress_jpeg.4} parent=5 // pred_region
        // Predicated region
        $region25: #{compress_jpeg.4} parent=23 // pred_check
          %p230 = pneg %p59
        $region26: #{compress_jpeg.4} parent=23 // pred_check_branch
          %232 = sbr.rel (%p230) target = $region28
        $region27: #{compress_jpeg.4} parent=23 // pred_region
          %s233 = sand.u32 %s49, 1
          %s234 = scalar_lea.sflag [#allocation3], %s233
          %s235 = sand.u32 %s49, 1
          %s236 = smul.addr %s235, 48
          %s237 = scalar_lea.vmem [#allocation2], %s236
          %s238 = smul.u32 2, %s24
          %s240 = ssub.s32 768, 768
          %241 = vsyncadd %s234, %s240
          %s242 = sadd.s32 %s25, %s238
          %s243 = smul.addr %s23, 6
          %s244 = sadd.s32 %s242, %s243
          %s245 = smul.addr %s244, 128
          %s246 = scalar_lea.hbm %s0, %s245
          %s247 = sshll.u32 %s237, 4
          %s248 = int_to_ptr.vmem [resolvable:$true] %s247
          %253 = dma.hbm_to_vmem [thread:$0]  %s246, 768, %s248, %s234, 128, 128, 8
        $region28: #{compress_jpeg.4} parent=23 // pred_fallthru
          _
      $region24: #{compress_jpeg.4} parent=5 // pred_fallthru
        _
      %p254 = scmp.le.s32.totalorder 1, %s16
      %p255 = scmp.lt.s32.totalorder %s16, 3
      %p256 = pnand %p254, %p255
      %p257 = pneg %p256
      // Predicated region
      $region29: #{compress_jpeg.4} parent=5 // pred_check
        _
      $region30: #{compress_jpeg.4} parent=5 // pred_check_branch
        %259 = sbr.rel (%p256) target = $region32
      $region31: #{compress_jpeg.4} parent=5 // pred_region
        %s260 = ssub.s32 %s16, 1
        %s261 = sand.u32 %s52, 1
        %s262 = scalar_lea.sflag [#allocation3], %s261
        %s263 = sand.u32 %s52, 1
        %s264 = smul.addr %s263, 48
        %s265 = scalar_lea.vmem [#allocation2], %s264
        // Predicated region
        $region33: #{compress_jpeg.4} parent=31 // pred_check
          %p266 = pneg %p65
        $region34: #{compress_jpeg.4} parent=31 // pred_check_branch
          %268 = sbr.rel (%p266) target = $region36
        $region35: #{compress_jpeg.4} parent=31 // pred_region
          %269 = dma.done %s262, 768
        $region36: #{compress_jpeg.4} parent=31 // pred_fallthru
          _
        // Predicated region
        $region37: #{compress_jpeg.4} parent=31 // pred_check
          %p270 = pneg %p86
        $region38: #{compress_jpeg.4} parent=31 // pred_check_branch
          %272 = sbr.rel (%p270) target = $region40
        $region39: #{compress_jpeg.4} parent=31 // pred_region
          %273 = dma.done [#allocation5], 128
        $region40: #{compress_jpeg.4} parent=31 // pred_fallthru
          _
        %s274 = sand.u32 %s52, 1
        %s275 = scalar_lea.sflag [#allocation3], %s274
        %s276 = sand.u32 %s52, 1
        %s277 = smul.addr %s276, 48
        %s278 = scalar_lea.vmem [#allocation2], %s277
        %p279 = pneg %p65
        %p280 = pneg %p62
        %p281 = pneg %p86
        %p282 = pneg %p83
        %p283 = pneg %p107
        %p284 = pneg %p104
        %p285 = pneg %p137
        %p286 = pneg %p134
        %s287 = smul.u32 2, %s27
        %p288 = scmp.lt.s32.totalorder %s26, 1
        %s289 = scalar_select %p288, %s26, 1
        %p290 = scmp.lt.s32.totalorder %s287, 1
        %s291 = scalar_select %p290, %s287, 1
        %p292 = scmp.lt.s32.totalorder %s28, 0
        %s293 = scalar_select %p292, %s28, 0
        %s294 = sadd.s32 %s293, %s291
        %s295 = smul.addr %s289, 2
        %s296 = sadd.s32 %s294, %s295
        %s297 = smul.addr %s296, 8
        %s298 = scalar_lea.vmem %s3, %s297
        %p299 = pneg %p167
        %p300 = pneg %p164
        %p301 = scmp.lt.s32.totalorder %s26, 1
        %s302 = scalar_select %p301, %s26, 1
        %p303 = scmp.lt.s32.totalorder %s27, 0
        %s304 = scalar_select %p303, %s27, 0
        %p305 = scmp.lt.s32.totalorder %s28, 0
        %s306 = scalar_select %p305, %s28, 0
        %s307 = sadd.s32 %s306, %s304
        %s308 = sadd.s32 %s307, %s302
        %s309 = smul.addr %s308, 8
        %s310 = scalar_lea.vmem %s4, %s309
        %p311 = pneg %p197
        %p312 = pneg %p194
        %p313 = scmp.lt.s32.totalorder %s26, 1
        %s314 = scalar_select %p313, %s26, 1
        %p315 = scmp.lt.s32.totalorder %s27, 0
        %s316 = scalar_select %p315, %s27, 0
        %p317 = scmp.lt.s32.totalorder %s28, 0
        %s318 = scalar_select %p317, %s28, 0
        %s319 = sadd.s32 %s318, %s316
        %s320 = sadd.s32 %s319, %s314
        %s321 = smul.addr %s320, 8
        %s322 = scalar_lea.vmem %s5, %s321
        %s323 = smul.u32 2, %s27
        %s324 = smul.u32 2, %s27
        %p325 = scmp.lt.s32.totalorder %s26, 1
        %s326 = scalar_select %p325, %s26, 1
        %p327 = scmp.lt.s32.totalorder %s324, 1
        %s328 = scalar_select %p327, %s324, 1
        %p329 = scmp.lt.s32.totalorder %s28, 0
        %s330 = scalar_select %p329, %s28, 0
        %s331 = sadd.s32 %s330, %s328
        %s332 = smul.addr %s326, 2
        %s333 = sadd.s32 %s331, %s332
        %s334 = smul.addr %s333, 8
        %s335 = scalar_lea.vmem %s3, %s334
        %s336 = smul.u32 2, %s27
        %p337 = scmp.lt.s32.totalorder %s26, 1
        %s338 = scalar_select %p337, %s26, 1
        %p339 = scmp.lt.s32.totalorder %s27, 0
        %s340 = scalar_select %p339, %s27, 0
        %p341 = scmp.lt.s32.totalorder %s28, 0
        %s342 = scalar_select %p341, %s28, 0
        %s343 = sadd.s32 %s342, %s340
        %s344 = sadd.s32 %s343, %s338
        %s345 = smul.addr %s344, 8
        %s346 = scalar_lea.vmem %s4, %s345
        %p347 = scmp.lt.s32.totalorder %s26, 1
        %s348 = scalar_select %p347, %s26, 1
        %p349 = scmp.lt.s32.totalorder %s27, 0
        %s350 = scalar_select %p349, %s27, 0
        %p351 = scmp.lt.s32.totalorder %s28, 0
        %s352 = scalar_select %p351, %s28, 0
        %s353 = sadd.s32 %s352, %s350
        %s354 = sadd.s32 %s353, %s348
        %s355 = smul.addr %s354, 8
        %s356 = scalar_lea.vmem %s5, %s355
        %v357 = vld [vmem:[%s265] sm:$0xff]
        %v358 = vld [vmem:[%s265 + $0x8] sm:$0xff]
        %s359 = scalar_lea.vmem %s265, 16 [#allocation2]
        %v360 = vld [vmem:[%s359] sm:$0xff]
        %v361 = vld [vmem:[%s359 + $0x8] sm:$0xff]
        %s362 = scalar_lea.vmem %s265, 32 [#allocation2]
        %v363 = vld [vmem:[%s362] sm:$0xff]
        %v364 = vld [vmem:[%s362 + $0x8] sm:$0xff]
        %v365 = vmul.f32 %v357, 76.245
        %v366 = vmul.f32 %v358, 76.245
        %v367 = vmul.f32 %v360, 149.685
        %v368 = vmul.f32 %v361, 149.685
        %v369 = vadd.f32 %v365, %v367
        %v370 = vadd.f32 %v366, %v368
        %v371 = vmul.f32 %v363, 29.07
        %v372 = vmul.f32 %v364, 29.07
        %v373 = vadd.f32 %v369, %v371
        %v374 = vadd.f32 %v370, %v372
        %v375 = vsub.f32 %v373, 128.0
        %v376 = vsub.f32 %v374, 128.0
        %vm377 = vcmask 130048
        %378 = vst.msk [vmem:[%s335] sm:$0xff] %vm377, %v375
        %379 = vst.msk [vmem:[%s335 + $0x8] sm:$0xff] %vm377, %v376
        %v380 = vmul.f32 %v357, -43.02768
        %v381 = vmul.f32 %v358, -43.02768
        %v382 = vmul.f32 %v360, -84.47232
        %v383 = vmul.f32 %v361, -84.47232
        %v384 = vadd.f32 %v380, %v382
        %v385 = vadd.f32 %v381, %v383
        %v386 = vmul.f32 %v363, 127.5
        %v387 = vmul.f32 %v364, 127.5
        %v388 = vadd.f32 %v384, %v386
        %v389 = vadd.f32 %v385, %v387
        %v390 = vmul.f32 %v357, 127.5
        %v391 = vmul.f32 %v358, 127.5
        %v392 = vmul.f32 %v360, -106.76544
        %v393 = vmul.f32 %v361, -106.76544
        %v394 = vadd.f32 %v390, %v392
        %v395 = vadd.f32 %v391, %v393
        %v396 = vmul.f32 %v363, -20.73456
        %v397 = vmul.f32 %v364, -20.73456
        %v398 = vadd.f32 %v394, %v396
        %v399 = vadd.f32 %v395, %v397
        %v400 = vld [vmem:[#allocation4] sm:$0xff]
        %v401 = vld [vmem:[%s2] sm:$0xff]
        %v402 = vld [vmem:[%s2 + $0x8] sm:$0xff]
        %v404 = vsel %vm377, %v400, 0
        %406 = vmatprep.subr.mxu0 0.0
        %407 = vmatpush1.msra.mxu0 %v388
        %408 = vmatprep.subr.mxu0 0.0
        %409 = vmatpush1.msra.mxu0 %v389
        %410 = vmatprep.subr.mxu0 0.0
        %411 = vmatpush1.msra.mxu0 0.0
        %412 = vmatprep.subr.mxu0 0.0
        %413 = vmatpush1.msra.mxu0 0.0
        %414 = vmatprep.subr.mxu0 0.0
        %415 = vmatpush1.msra.mxu0 0.0
        %416 = vmatprep.subr.mxu0 0.0
        %417 = vmatpush1.msra.mxu0 0.0
        %418 = vmatprep.subr.mxu0 0.0
        %419 = vmatpush1.msra.mxu0 0.0
        %420 = vmatprep.subr.mxu0 0.0
        %421 = vmatpush1.msra.mxu0 0.0
        %422 = vmatprep.subr.mxu0 0.0
        %423 = vmatpush1.msra.mxu0 0.0
        %424 = vmatprep.subr.mxu0 0.0
        %425 = vmatpush1.msra.mxu0 0.0
        %426 = vmatprep.subr.mxu0 0.0
        %427 = vmatpush1.msra.mxu0 0.0
        %428 = vmatprep.subr.mxu0 0.0
        %429 = vmatpush1.msra.mxu0 0.0
        %430 = vmatprep.subr.mxu0 0.0
        %431 = vmatpush1.msra.mxu0 0.0
        %432 = vmatprep.subr.mxu0 0.0
        %433 = vmatpush1.msra.mxu0 0.0
        %434 = vmatprep.subr.mxu0 0.0
        %435 = vmatpush1.msra.mxu0 0.0
        %436 = vmatprep.subr.mxu0 0.0
        %437 = vmatpush1.msra.mxu0 0.0
        %438 = vmatprep.subr.mxu0 0.0
        %439 = vmatpush1.msra.mxu0 0.0
        %440 = vmatprep.subr.mxu0 0.0
        %441 = vmatpush1.msra.mxu0 0.0
        %442 = vmatprep.subr.mxu0 0.0
        %443 = vmatpush1.msra.mxu0 0.0
        %444 = vmatprep.subr.mxu0 0.0
        %445 = vmatpush1.msra.mxu0 0.0
        %446 = vmatprep.subr.mxu0 0.0
        %447 = vmatpush1.msra.mxu0 0.0
        %448 = vmatprep.subr.mxu0 0.0
        %449 = vmatpush1.msra.mxu0 0.0
        %450 = vmatprep.subr.mxu0 0.0
        %451 = vmatpush1.msra.mxu0 0.0
        %452 = vmatprep.subr.mxu0 0.0
        %453 = vmatpush1.msra.mxu0 0.0
        %454 = vmatprep.subr.mxu0 0.0
        %455 = vmatpush1.msra.mxu0 0.0
        %456 = vmatprep.subr.mxu0 0.0
        %457 = vmatpush1.msra.mxu0 0.0
        %458 = vmatprep.subr.mxu0 0.0
        %459 = vmatpush1.msra.mxu0 0.0
        %460 = vmatprep.subr.mxu0 0.0
        %461 = vmatpush1.msra.mxu0 0.0
        %462 = vmatprep.subr.mxu0 0.0
        %463 = vmatpush1.msra.mxu0 0.0
        %464 = vmatprep.subr.mxu0 0.0
        %465 = vmatpush1.msra.mxu0 0.0
        %466 = vmatprep.subr.mxu0 0.0
        %467 = vmatpush1.msra.mxu0 0.0
        %468 = vmatprep.subr.mxu0 0.0
        %469 = vmatpush1.msra.mxu0 0.0
        %470 = vmatprep.mubr.f32.mxu0 0.0
        %471 = vmatmul.mubr.f32.gmra.mrb[0].mxu0 %v404
        %v472 = vpop.f32.mrb[0].mxu0
        %v473 = vadd.f32 0.0, %v472
        %v474 = vpop.f32.mrb[0].mxu0
        %475 = vdwg.mxu0
        %v477 = vsel %vm377, %v473, 0
        %479 = vmatprep.subr.mxu0 0.0
        %480 = vmatpush1.msra.mxu0 %v401
        %481 = vmatprep.subr.mxu0 0.0
        %482 = vmatpush1.msra.mxu0 %v402
        %483 = vmatprep.subr.mxu0 0.0
        %484 = vmatpush1.msra.mxu0 0.0
        %485 = vmatprep.subr.mxu0 0.0
        %486 = vmatpush1.msra.mxu0 0.0
        %487 = vmatprep.subr.mxu0 0.0
        %488 = vmatpush1.msra.mxu0 0.0
        %489 = vmatprep.subr.mxu0 0.0
        %490 = vmatpush1.msra.mxu0 0.0
        %491 = vmatprep.subr.mxu0 0.0
        %492 = vmatpush1.msra.mxu0 0.0
        %493 = vmatprep.subr.mxu0 0.0
        %494 = vmatpush1.msra.mxu0 0.0
        %495 = vmatprep.subr.mxu0 0.0
        %496 = vmatpush1.msra.mxu0 0.0
        %497 = vmatprep.subr.mxu0 0.0
        %498 = vmatpush1.msra.mxu0 0.0
        %499 = vmatprep.subr.mxu0 0.0
        %500 = vmatpush1.msra.mxu0 0.0
        %501 = vmatprep.subr.mxu0 0.0
        %502 = vmatpush1.msra.mxu0 0.0
        %503 = vmatprep.subr.mxu0 0.0
        %504 = vmatpush1.msra.mxu0 0.0
        %505 = vmatprep.subr.mxu0 0.0
        %506 = vmatpush1.msra.mxu0 0.0
        %507 = vmatprep.subr.mxu0 0.0
        %508 = vmatpush1.msra.mxu0 0.0
        %509 = vmatprep.subr.mxu0 0.0
        %510 = vmatpush1.msra.mxu0 0.0
        %511 = vmatprep.subr.mxu0 0.0
        %512 = vmatpush1.msra.mxu0 0.0
        %513 = vmatprep.subr.mxu0 0.0
        %514 = vmatpush1.msra.mxu0 0.0
        %515 = vmatprep.subr.mxu0 0.0
        %516 = vmatpush1.msra.mxu0 0.0
        %517 = vmatprep.subr.mxu0 0.0
        %518 = vmatpush1.msra.mxu0 0.0
        %519 = vmatprep.subr.mxu0 0.0
        %520 = vmatpush1.msra.mxu0 0.0
        %521 = vmatprep.subr.mxu0 0.0
        %522 = vmatpush1.msra.mxu0 0.0
        %523 = vmatprep.subr.mxu0 0.0
        %524 = vmatpush1.msra.mxu0 0.0
        %525 = vmatprep.subr.mxu0 0.0
        %526 = vmatpush1.msra.mxu0 0.0
        %527 = vmatprep.subr.mxu0 0.0
        %528 = vmatpush1.msra.mxu0 0.0
        %529 = vmatprep.subr.mxu0 0.0
        %530 = vmatpush1.msra.mxu0 0.0
        %531 = vmatprep.subr.mxu0 0.0
        %532 = vmatpush1.msra.mxu0 0.0
        %533 = vmatprep.subr.mxu0 0.0
        %534 = vmatpush1.msra.mxu0 0.0
        %535 = vmatprep.subr.mxu0 0.0
        %536 = vmatpush1.msra.mxu0 0.0
        %537 = vmatprep.subr.mxu0 0.0
        %538 = vmatpush1.msra.mxu0 0.0
        %539 = vmatprep.subr.mxu0 0.0
        %540 = vmatpush1.msra.mxu0 0.0
        %541 = vmatprep.subr.mxu0 0.0
        %542 = vmatpush1.msra.mxu0 0.0
        %543 = vmatprep.mubr.f32.mxu0 0.0
        %544 = vmatmul.mubr.f32.gmra.mrb[0].mxu0 %v477
        %v545 = vpop.f32.mrb[0].mxu0
        %v546 = vadd.f32 0.0, %v545
        %v547 = vpop.f32.mrb[0].mxu0
        %548 = vdwg.mxu0
        %vm549 = vcmask 64512
        %550 = vst.msk [vmem:[%s346] sm:$0xff] %vm549, %v546
        %551 = vmatprep.subr.mxu0 0.0
        %552 = vmatpush1.msra.mxu0 %v398
        %553 = vmatprep.subr.mxu0 0.0
        %554 = vmatpush1.msra.mxu0 %v399
        %555 = vmatprep.subr.mxu0 0.0
        %556 = vmatpush1.msra.mxu0 0.0
        %557 = vmatprep.subr.mxu0 0.0
        %558 = vmatpush1.msra.mxu0 0.0
        %559 = vmatprep.subr.mxu0 0.0
        %560 = vmatpush1.msra.mxu0 0.0
        %561 = vmatprep.subr.mxu0 0.0
        %562 = vmatpush1.msra.mxu0 0.0
        %563 = vmatprep.subr.mxu0 0.0
        %564 = vmatpush1.msra.mxu0 0.0
        %565 = vmatprep.subr.mxu0 0.0
        %566 = vmatpush1.msra.mxu0 0.0
        %567 = vmatprep.subr.mxu0 0.0
        %568 = vmatpush1.msra.mxu0 0.0
        %569 = vmatprep.subr.mxu0 0.0
        %570 = vmatpush1.msra.mxu0 0.0
        %571 = vmatprep.subr.mxu0 0.0
        %572 = vmatpush1.msra.mxu0 0.0
        %573 = vmatprep.subr.mxu0 0.0
        %574 = vmatpush1.msra.mxu0 0.0
        %575 = vmatprep.subr.mxu0 0.0
        %576 = vmatpush1.msra.mxu0 0.0
        %577 = vmatprep.subr.mxu0 0.0
        %578 = vmatpush1.msra.mxu0 0.0
        %579 = vmatprep.subr.mxu0 0.0
        %580 = vmatpush1.msra.mxu0 0.0
        %581 = vmatprep.subr.mxu0 0.0
        %582 = vmatpush1.msra.mxu0 0.0
        %583 = vmatprep.subr.mxu0 0.0
        %584 = vmatpush1.msra.mxu0 0.0
        %585 = vmatprep.subr.mxu0 0.0
        %586 = vmatpush1.msra.mxu0 0.0
        %587 = vmatprep.subr.mxu0 0.0
        %588 = vmatpush1.msra.mxu0 0.0
        %589 = vmatprep.subr.mxu0 0.0
        %590 = vmatpush1.msra.mxu0 0.0
        %591 = vmatprep.subr.mxu0 0.0
        %592 = vmatpush1.msra.mxu0 0.0
        %593 = vmatprep.subr.mxu0 0.0
        %594 = vmatpush1.msra.mxu0 0.0
        %595 = vmatprep.subr.mxu0 0.0
        %596 = vmatpush1.msra.mxu0 0.0
        %597 = vmatprep.subr.mxu0 0.0
        %598 = vmatpush1.msra.mxu0 0.0
        %599 = vmatprep.subr.mxu0 0.0
        %600 = vmatpush1.msra.mxu0 0.0
        %601 = vmatprep.subr.mxu0 0.0
        %602 = vmatpush1.msra.mxu0 0.0
        %603 = vmatprep.subr.mxu0 0.0
        %604 = vmatpush1.msra.mxu0 0.0
        %605 = vmatprep.subr.mxu0 0.0
        %606 = vmatpush1.msra.mxu0 0.0
        %607 = vmatprep.subr.mxu0 0.0
        %608 = vmatpush1.msra.mxu0 0.0
        %609 = vmatprep.subr.mxu0 0.0
        %610 = vmatpush1.msra.mxu0 0.0
        %611 = vmatprep.subr.mxu0 0.0
        %612 = vmatpush1.msra.mxu0 0.0
        %613 = vmatprep.subr.mxu0 0.0
        %614 = vmatpush1.msra.mxu0 0.0
        %615 = vmatprep.mubr.f32.mxu0 0.0
        %616 = vmatmul.mubr.f32.gmra.mrb[0].mxu0 %v404
        %v617 = vpop.f32.mrb[0].mxu0
        %v618 = vadd.f32 0.0, %v617
        %v619 = vpop.f32.mrb[0].mxu0
        %620 = vdwg.mxu0
        %v622 = vsel %vm377, %v618, 0
        %624 = vmatprep.subr.mxu0 0.0
        %625 = vmatpush1.msra.mxu0 %v401
        %626 = vmatprep.subr.mxu0 0.0
        %627 = vmatpush1.msra.mxu0 %v402
        %628 = vmatprep.subr.mxu0 0.0
        %629 = vmatpush1.msra.mxu0 0.0
        %630 = vmatprep.subr.mxu0 0.0
        %631 = vmatpush1.msra.mxu0 0.0
        %632 = vmatprep.subr.mxu0 0.0
        %633 = vmatpush1.msra.mxu0 0.0
        %634 = vmatprep.subr.mxu0 0.0
        %635 = vmatpush1.msra.mxu0 0.0
        %636 = vmatprep.subr.mxu0 0.0
        %637 = vmatpush1.msra.mxu0 0.0
        %638 = vmatprep.subr.mxu0 0.0
        %639 = vmatpush1.msra.mxu0 0.0
        %640 = vmatprep.subr.mxu0 0.0
        %641 = vmatpush1.msra.mxu0 0.0
        %642 = vmatprep.subr.mxu0 0.0
        %643 = vmatpush1.msra.mxu0 0.0
        %644 = vmatprep.subr.mxu0 0.0
        %645 = vmatpush1.msra.mxu0 0.0
        %646 = vmatprep.subr.mxu0 0.0
        %647 = vmatpush1.msra.mxu0 0.0
        %648 = vmatprep.subr.mxu0 0.0
        %649 = vmatpush1.msra.mxu0 0.0
        %650 = vmatprep.subr.mxu0 0.0
        %651 = vmatpush1.msra.mxu0 0.0
        %652 = vmatprep.subr.mxu0 0.0
        %653 = vmatpush1.msra.mxu0 0.0
        %654 = vmatprep.subr.mxu0 0.0
        %655 = vmatpush1.msra.mxu0 0.0
        %656 = vmatprep.subr.mxu0 0.0
        %657 = vmatpush1.msra.mxu0 0.0
        %658 = vmatprep.subr.mxu0 0.0
        %659 = vmatpush1.msra.mxu0 0.0
        %660 = vmatprep.subr.mxu0 0.0
        %661 = vmatpush1.msra.mxu0 0.0
        %662 = vmatprep.subr.mxu0 0.0
        %663 = vmatpush1.msra.mxu0 0.0
        %664 = vmatprep.subr.mxu0 0.0
        %665 = vmatpush1.msra.mxu0 0.0
        %666 = vmatprep.subr.mxu0 0.0
        %667 = vmatpush1.msra.mxu0 0.0
        %668 = vmatprep.subr.mxu0 0.0
        %669 = vmatpush1.msra.mxu0 0.0
        %670 = vmatprep.subr.mxu0 0.0
        %671 = vmatpush1.msra.mxu0 0.0
        %672 = vmatprep.subr.mxu0 0.0
        %673 = vmatpush1.msra.mxu0 0.0
        %674 = vmatprep.subr.mxu0 0.0
        %675 = vmatpush1.msra.mxu0 0.0
        %676 = vmatprep.subr.mxu0 0.0
        %677 = vmatpush1.msra.mxu0 0.0
        %678 = vmatprep.subr.mxu0 0.0
        %679 = vmatpush1.msra.mxu0 0.0
        %680 = vmatprep.subr.mxu0 0.0
        %681 = vmatpush1.msra.mxu0 0.0
        %682 = vmatprep.subr.mxu0 0.0
        %683 = vmatpush1.msra.mxu0 0.0
        %684 = vmatprep.subr.mxu0 0.0
        %685 = vmatpush1.msra.mxu0 0.0
        %686 = vmatprep.subr.mxu0 0.0
        %687 = vmatpush1.msra.mxu0 0.0
        %688 = vmatprep.mubr.f32.mxu0 0.0
        %689 = vmatmul.mubr.f32.gmra.mrb[0].mxu0 %v622
        %v690 = vpop.f32.mrb[0].mxu0
        %v691 = vadd.f32 0.0, %v690
        %v692 = vpop.f32.mrb[0].mxu0
        %693 = vdwg.mxu0
        %694 = vst.msk [vmem:[%s356] sm:$0xff] %vm549, %v691
        %s695 = smul.u32 2, %s27
        %p696 = scmp.lt.s32.totalorder %s26, 1
        %s697 = scalar_select %p696, %s26, 1
        %p698 = scmp.lt.s32.totalorder %s695, 1
        %s699 = scalar_select %p698, %s695, 1
        %p700 = scmp.lt.s32.totalorder %s28, 0
        %s701 = scalar_select %p700, %s28, 0
        %s702 = sadd.s32 %s701, %s699
        %s703 = smul.addr %s697, 2
        %s704 = sadd.s32 %s702, %s703
        %s705 = smul.addr %s704, 8
        %s706 = scalar_lea.vmem %s3, %s705
        %p707 = scmp.lt.s32.totalorder %s26, 1
        %s708 = scalar_select %p707, %s26, 1
        %p709 = scmp.lt.s32.totalorder %s27, 0
        %s710 = scalar_select %p709, %s27, 0
        %p711 = scmp.lt.s32.totalorder %s28, 0
        %s712 = scalar_select %p711, %s28, 0
        %s713 = sadd.s32 %s712, %s710
        %s714 = sadd.s32 %s713, %s708
        %s715 = smul.addr %s714, 8
        %s716 = scalar_lea.vmem %s4, %s715
        %p717 = scmp.lt.s32.totalorder %s26, 1
        %s718 = scalar_select %p717, %s26, 1
        %p719 = scmp.lt.s32.totalorder %s27, 0
        %s720 = scalar_select %p719, %s27, 0
        %p721 = scmp.lt.s32.totalorder %s28, 0
        %s722 = scalar_select %p721, %s28, 0
        %s723 = sadd.s32 %s722, %s720
        %s724 = sadd.s32 %s723, %s718
        %s725 = smul.addr %s724, 8
        %s726 = scalar_lea.vmem %s5, %s725
        // Predicated region
        $region41: #{compress_jpeg.4} parent=31 // pred_check
          %p727 = pneg %p134
        $region42: #{compress_jpeg.4} parent=31 // pred_check_branch
          %729 = sbr.rel (%p727) target = $region44
        $region43: #{compress_jpeg.4} parent=31 // pred_region
          %s730 = smul.u32 2, %s27
        $region44: #{compress_jpeg.4} parent=31 // pred_fallthru
          _
        // Predicated region
        $region45: #{compress_jpeg.4} parent=31 // pred_check
          %p731 = pneg %p164
        $region46: #{compress_jpeg.4} parent=31 // pred_check_branch
          %733 = sbr.rel (%p731) target = $region48
        $region47: #{compress_jpeg.4} parent=31 // pred_region
          _
        $region48: #{compress_jpeg.4} parent=31 // pred_fallthru
          _
        // Predicated region
        $region49: #{compress_jpeg.4} parent=31 // pred_check
          %p734 = pneg %p194
        $region50: #{compress_jpeg.4} parent=31 // pred_check_branch
          %736 = sbr.rel (%p734) target = $region52
        $region51: #{compress_jpeg.4} parent=31 // pred_region
          _
        $region52: #{compress_jpeg.4} parent=31 // pred_fallthru
          _
      $region32: #{compress_jpeg.4} parent=5 // pred_fallthru
        _
      %p737 = scmp.le.s32.totalorder 2, %s16
      // Predicated region
      $region53: #{compress_jpeg.4} parent=5 // pred_check
        %p738 = pneg %p737
      $region54: #{compress_jpeg.4} parent=5 // pred_check_branch
        %740 = sbr.rel (%p738) target = $region56
      $region55: #{compress_jpeg.4} parent=5 // pred_region
        %s741 = ssub.s32 %s16, 2
        // Predicated region
        $region57: #{compress_jpeg.4} parent=55 // pred_check
          %p742 = pneg %p140
        $region58: #{compress_jpeg.4} parent=55 // pred_check_branch
          %744 = sbr.rel (%p742) target = $region60
        $region59: #{compress_jpeg.4} parent=55 // pred_region
          %s745 = smul.u32 2, %s30
          %p746 = scmp.lt.s32.totalorder %s29, 1
          %s747 = scalar_select %p746, %s29, 1
          %p748 = scmp.lt.s32.totalorder %s745, 1
          %s749 = scalar_select %p748, %s745, 1
          %p750 = scmp.lt.s32.totalorder %s31, 0
          %s751 = scalar_select %p750, %s31, 0
          %s752 = sadd.s32 %s751, %s749
          %s753 = smul.addr %s747, 2
          %s754 = sadd.s32 %s752, %s753
          %s755 = smul.addr %s754, 8
          %s756 = scalar_lea.vmem %s3, %s755
        $region60: #{compress_jpeg.4} parent=55 // pred_fallthru
          _
        // Predicated region
        $region61: #{compress_jpeg.4} parent=55 // pred_check
          %p757 = pneg %p170
        $region62: #{compress_jpeg.4} parent=55 // pred_check_branch
          %759 = sbr.rel (%p757) target = $region64
        $region63: #{compress_jpeg.4} parent=55 // pred_region
          %p760 = scmp.lt.s32.totalorder %s29, 1
          %s761 = scalar_select %p760, %s29, 1
          %p762 = scmp.lt.s32.totalorder %s30, 0
          %s763 = scalar_select %p762, %s30, 0
          %p764 = scmp.lt.s32.totalorder %s31, 0
          %s765 = scalar_select %p764, %s31, 0
          %s766 = sadd.s32 %s765, %s763
          %s767 = sadd.s32 %s766, %s761
          %s768 = smul.addr %s767, 8
          %s769 = scalar_lea.vmem %s4, %s768
        $region64: #{compress_jpeg.4} parent=55 // pred_fallthru
          _
        // Predicated region
        $region65: #{compress_jpeg.4} parent=55 // pred_check
          %p770 = pneg %p200
        $region66: #{compress_jpeg.4} parent=55 // pred_check_branch
          %772 = sbr.rel (%p770) target = $region68
        $region67: #{compress_jpeg.4} parent=55 // pred_region
          %p773 = scmp.lt.s32.totalorder %s29, 1
          %s774 = scalar_select %p773, %s29, 1
          %p775 = scmp.lt.s32.totalorder %s30, 0
          %s776 = scalar_select %p775, %s30, 0
          %p777 = scmp.lt.s32.totalorder %s31, 0
          %s778 = scalar_select %p777, %s31, 0
          %s779 = sadd.s32 %s778, %s776
          %s780 = sadd.s32 %s779, %s774
          %s781 = smul.addr %s780, 8
          %s782 = scalar_lea.vmem %s5, %s781
        $region68: #{compress_jpeg.4} parent=55 // pred_fallthru
          _
      $region56: #{compress_jpeg.4} parent=5 // pred_fallthru
        _
    $region6: #{compress_jpeg.4} parent=1 // loop_footer
      %s20 = sadd.s32 1, %s16
    $region7: #{compress_jpeg.4} parent=1 // loop_footer_branch
      %15 = sbr.rel target = $region3
    $region8: #{compress_jpeg.4} parent=1 // loop_exit
      _
    %783 = vsyncpa [#allocation3], 1
    %s784 = scalar_lea.sflag [#allocation3], 1
    %785 = vsyncpa %s784, 1
    %786 = vsyncpa [#allocation5], 1

</llo_original>
